<compile_context>
chip_gen: v5e
topology: v5e:2x2
jax: 0.10.0
libtpu: 0.0.40
codegen_flags: <defaults>
</compile_context>

<pallas_src>
import functools
import math

import jax
import jax.numpy as jnp
from jax.experimental import pallas as pl
from jax.experimental.pallas import tpu as pltpu

LN_EPS = 1e-5


def _layer_norm(h, w, b, eps=LN_EPS):
    # h: (R, C), w/b: (1, C)
    mu = jnp.mean(h, axis=-1, keepdims=True)
    xc = h - mu
    var = jnp.mean(xc * xc, axis=-1, keepdims=True)
    return xc * jax.lax.rsqrt(var + eps) * w + b


def _gelu_exact(x):
    # PyTorch F.gelu default is exact (erf) gelu.
    return 0.5 * x * (1.0 + jax.lax.erf(x * (1.0 / math.sqrt(2.0))))


# ---------------------------------------------------------------------------
# Fused kernel: pos-emb + all encoder layers + final LayerNorm
# ---------------------------------------------------------------------------

def fused_transformer_kernel(x_ref, pos_ref,
                             lnp_w_ref, lnp_b_ref,
                             wqkv_ref, wproj_ref, bproj_ref,
                             ln1_w_ref, ln1_b_ref,
                             w1_ref, b1_ref, w2_ref, b2_ref,
                             norm_w_ref, norm_b_ref,
                             out_ref, *,
                             num_layers, num_heads, head_dim, batch, seq):
    dim = num_heads * head_dim
    scale = head_dim ** -0.5

    # positional embedding (pre-tiled to (B*N, C) rows in the wrapper)
    x = x_ref[...] + pos_ref[...]                                   # (R, C), R = B*N

    for l in range(num_layers):                                     # statically unrolled
        # ---- pre-norm ----
        h = _layer_norm(x, lnp_w_ref[l], lnp_b_ref[l])

        # ---- fused QKV projection: one (R,C) x (C,3C) matmul ----
        qkv = jnp.dot(h, wqkv_ref[l], preferred_element_type=jnp.float32)  # (R, 3C)

        # scale q once for all heads (q * scale instead of scaling (N,N) logits)
        q_all = qkv[:, :dim] * scale                                 # (R, C)
        k_all = qkv[:, dim:2 * dim]                                  # (R, C)
        v_all = qkv[:, 2 * dim:3 * dim]                              # (R, C)

        # ---- multi-head self-attention, batched over B per head ----
        head_outs = []
        for hh in range(num_heads):
            lo = hh * head_dim
            qb = q_all[:, lo:lo + head_dim].reshape(batch, seq, head_dim)
            kb = k_all[:, lo:lo + head_dim].reshape(batch, seq, head_dim)
            vb = v_all[:, lo:lo + head_dim].reshape(batch, seq, head_dim)
            s = jnp.einsum('bqd,bkd->bqk', qb, kb,
                           preferred_element_type=jnp.float32)       # (B, N, N)
            s = s - jnp.max(s, axis=-1, keepdims=True)
            p = jnp.exp(s)
            p = p * pl.reciprocal(jnp.sum(p, axis=-1, keepdims=True), approx=True)
            o = jnp.einsum('bqk,bkd->bqd', p, vb,
                           preferred_element_type=jnp.float32)       # (B, N, HD)
            head_outs.append(o.reshape(batch * seq, head_dim))

        attn = jnp.concatenate(head_outs, axis=-1)                   # (R, C)
        attn = jnp.dot(attn, wproj_ref[l],
                       preferred_element_type=jnp.float32) + bproj_ref[l]

        # ---- residual + norm1 ----
        x = _layer_norm(x + attn, ln1_w_ref[l], ln1_b_ref[l])

        # ---- feed-forward ----
        h1 = jnp.dot(x, w1_ref[l], preferred_element_type=jnp.float32) + b1_ref[l]
        h1 = _gelu_exact(h1)
        h2 = jnp.dot(h1, w2_ref[l], preferred_element_type=jnp.float32) + b2_ref[l]
        x = x + h2

    # ---- final LayerNorm, single writeback ----
    out_ref[...] = _layer_norm(x, norm_w_ref[...], norm_b_ref[...])


# ---------------------------------------------------------------------------
# Wrapper
# ---------------------------------------------------------------------------

def transformer_classifier_forward(x, params, *, num_heads):
    B, N, C = x.shape
    L = params["wqkv"].shape[0]
    FF = params["w1"].shape[-1]
    head_dim = C // num_heads
    R = B * N

    x2d = x.reshape(R, C)
    pos2d = jnp.tile(params["pos_emb"].reshape(N, C), (B, 1))        # (R, C)

    kernel = functools.partial(
        fused_transformer_kernel,
        num_layers=L, num_heads=num_heads, head_dim=head_dim, batch=B, seq=N)

    def _full(shape):
        nd = len(shape)
        return pl.BlockSpec(shape, lambda i, _nd=nd: (0,) * _nd)

    out2d = pl.pallas_call(
        kernel,
        out_shape=jax.ShapeDtypeStruct((R, C), jnp.float32),
        grid=(1,),                                                   # single step; everything VMEM-resident
        in_specs=[
            _full((R, C)), _full((R, C)),                            # x, pos
            _full((L, 1, C)), _full((L, 1, C)),                      # pre_norm w, b
            _full((L, C, 3 * C)),                                    # fused Wqkv
            _full((L, C, C)), _full((L, 1, C)),                      # Wproj, bproj
            _full((L, 1, C)), _full((L, 1, C)),                      # norm1 w, b
            _full((L, C, FF)), _full((L, 1, FF)),                    # linear1
            _full((L, FF, C)), _full((L, 1, C)),                     # linear2
            _full((1, C)), _full((1, C)),                            # final norm w, b
        ],
        out_specs=_full((R, C)),
        compiler_params=pltpu.CompilerParams(dimension_semantics=("arbitrary",)),
    )(x2d, pos2d,
      params["lnp_w"], params["lnp_b"],
      params["wqkv"], params["wproj"], params["bproj"],
      params["ln1_w"], params["ln1_b"],
      params["w1"], params["b1"], params["w2"], params["b2"],
      params["norm_w"], params["norm_b"])
    return out2d.reshape(B, N, C)


# ---------------------------------------------------------------------------
# Pure-JAX reference (same math, PyTorch layout) for a sanity check
# ---------------------------------------------------------------------------

def _ref_ln(x, w, b, eps=LN_EPS):
    mu = jnp.mean(x, axis=-1, keepdims=True)
    var = jnp.mean((x - mu) ** 2, axis=-1, keepdims=True)
    return (x - mu) * jax.lax.rsqrt(var + eps) * w + b


def reference_forward(x, params, *, num_heads):
    B, N, C = x.shape
    H, HD = num_heads, C // num_heads
    L = params["wqkv"].shape[0]
    y = x + params["pos_emb"]
    for l in range(L):
        h = _ref_ln(y, params["lnp_w"][l, 0], params["lnp_b"][l, 0])
        qkv = (h @ params["wqkv"][l]).reshape(B, N, 3, H, HD).transpose(2, 0, 3, 1, 4)
        q, k, v = qkv[0], qkv[1], qkv[2]
        s = jnp.einsum('bhqd,bhkd->bhqk', q, k) * (HD ** -0.5)
        p = jax.nn.softmax(s, axis=-1)
        o = jnp.einsum('bhqk,bhkd->bhqd', p, v).transpose(0, 2, 1, 3).reshape(B, N, C)
        attn = o @ params["wproj"][l] + params["bproj"][l, 0]
        y = _ref_ln(y + attn, params["ln1_w"][l, 0], params["ln1_b"][l, 0])
        h1 = jax.nn.gelu(y @ params["w1"][l] + params["b1"][l, 0], approximate=False)
        y = y + (h1 @ params["w2"][l] + params["b2"][l, 0])
    return _ref_ln(y, params["norm_w"][0], params["norm_b"][0])


# ---------------------------------------------------------------------------
# Deterministic synthetic parameters (matches module __init__ shapes; trunc_normal
# replaced by plain normal * std — synthetic init, not a checkpoint). Weights are
# layer-stacked so the fused kernel can index them with a static layer index.
# ---------------------------------------------------------------------------

def init_params(key, *, num_layers, seq_len, dim, num_heads, mlp_ratio):
    ff = int(dim * mlp_ratio)
    keys = jax.random.split(key, 5)
    return dict(
        pos_emb=0.2 * jax.random.normal(keys[0], (1, seq_len, dim), jnp.float32),
        lnp_w=jnp.ones((num_layers, 1, dim), jnp.float32),
        lnp_b=jnp.zeros((num_layers, 1, dim), jnp.float32),
        wqkv=0.02 * jax.random.normal(keys[1], (num_layers, dim, 3 * dim), jnp.float32),
        wproj=0.02 * jax.random.normal(keys[2], (num_layers, dim, dim), jnp.float32),
        bproj=jnp.zeros((num_layers, 1, dim), jnp.float32),
        ln1_w=jnp.ones((num_layers, 1, dim), jnp.float32),
        ln1_b=jnp.zeros((num_layers, 1, dim), jnp.float32),
        w1=0.02 * jax.random.normal(keys[3], (num_layers, dim, ff), jnp.float32),
        b1=jnp.zeros((num_layers, 1, ff), jnp.float32),
        w2=0.02 * jax.random.normal(keys[4], (num_layers, ff, dim), jnp.float32),
        b2=jnp.zeros((num_layers, 1, dim), jnp.float32),
        norm_w=jnp.ones((1, dim), jnp.float32),
        norm_b=jnp.zeros((1, dim), jnp.float32),
    )


if __name__ == "__main__":
    # Small configuration consistent with the module:
    # embedding_dim=32, num_heads=4, mlp_ratio=4 -> dim_feedforward=128,
    # num_layers=2, sequence_length=8, batch=2, seq_pool=True,
    # positional_embedding='learnable'.
    B, N, C = 2, 8, 32
    NUM_HEADS, NUM_LAYERS, MLP_RATIO = 4, 2, 4.0

    key = jax.random.PRNGKey(0)
    k_x, k_p = jax.random.split(key)
    x = jax.random.normal(k_x, (B, N, C), jnp.float32)

    params = init_params(k_p, num_layers=NUM_LAYERS, seq_len=N, dim=C,
                         num_heads=NUM_HEADS, mlp_ratio=MLP_RATIO)

    out = transformer_classifier_forward(x, params, num_heads=NUM_HEADS)
    out = jax.block_until_ready(out)

    assert out.shape == (B, N, C) and out.dtype == jnp.float32

    # numerical sanity check vs a pure-JAX reference (loose tol: softmax uses
    # the approximate EUP reciprocal inside the kernel)
    ref = jax.block_until_ready(reference_forward(x, params, num_heads=NUM_HEADS))
    max_err = float(jnp.max(jnp.abs(out - ref)))
    assert max_err < 1e-2, f"mismatch vs reference: max abs err = {max_err}"

    print("KERNEL_OK")
</pallas_src>

<mosaic_0001>
module attributes {stable_mosaic.version = 11 : i64} {
  func.func @fused_transformer_kernel(%arg0: i32, %arg1: memref<16x32xf32, #tpu.memory_space<vmem>>, %arg2: memref<16x32xf32, #tpu.memory_space<vmem>>, %arg3: memref<2x1x32xf32, #tpu.memory_space<vmem>>, %arg4: memref<2x1x32xf32, #tpu.memory_space<vmem>>, %arg5: memref<2x32x96xf32, #tpu.memory_space<vmem>>, %arg6: memref<2x32x32xf32, #tpu.memory_space<vmem>>, %arg7: memref<2x1x32xf32, #tpu.memory_space<vmem>>, %arg8: memref<2x1x32xf32, #tpu.memory_space<vmem>>, %arg9: memref<2x1x32xf32, #tpu.memory_space<vmem>>, %arg10: memref<2x32x128xf32, #tpu.memory_space<vmem>>, %arg11: memref<2x1x128xf32, #tpu.memory_space<vmem>>, %arg12: memref<2x128x32xf32, #tpu.memory_space<vmem>>, %arg13: memref<2x1x32xf32, #tpu.memory_space<vmem>>, %arg14: memref<1x32xf32, #tpu.memory_space<vmem>>, %arg15: memref<1x32xf32, #tpu.memory_space<vmem>>, %arg16: memref<16x32xf32, #tpu.memory_space<vmem>>) attributes {dimension_semantics = [#tpu.dimension_semantics<arbitrary>], iteration_bounds = array<i64: 1>, scalar_prefetch = 0 : i64, scratch_operands = 0 : i64, tpu.core_type = #tpu.core_type<tc>, window_params = [{pipeline_mode = #tpu.pipeline_mode<synchronous>, transform_indices = @transform_0, window_bounds = array<i64: 16, 32>}, {pipeline_mode = #tpu.pipeline_mode<synchronous>, transform_indices = @transform_1, window_bounds = array<i64: 16, 32>}, {pipeline_mode = #tpu.pipeline_mode<synchronous>, transform_indices = @transform_2, window_bounds = array<i64: 2, 1, 32>}, {pipeline_mode = #tpu.pipeline_mode<synchronous>, transform_indices = @transform_3, window_bounds = array<i64: 2, 1, 32>}, {pipeline_mode = #tpu.pipeline_mode<synchronous>, transform_indices = @transform_4, window_bounds = array<i64: 2, 32, 96>}, {pipeline_mode = #tpu.pipeline_mode<synchronous>, transform_indices = @transform_5, window_bounds = array<i64: 2, 32, 32>}, {pipeline_mode = #tpu.pipeline_mode<synchronous>, transform_indices = @transform_6, window_bounds = array<i64: 2, 1, 32>}, {pipeline_mode = #tpu.pipeline_mode<synchronous>, transform_indices = @transform_7, window_bounds = array<i64: 2, 1, 32>}, {pipeline_mode = #tpu.pipeline_mode<synchronous>, transform_indices = @transform_8, window_bounds = array<i64: 2, 1, 32>}, {pipeline_mode = #tpu.pipeline_mode<synchronous>, transform_indices = @transform_9, window_bounds = array<i64: 2, 32, 128>}, {pipeline_mode = #tpu.pipeline_mode<synchronous>, transform_indices = @transform_10, window_bounds = array<i64: 2, 1, 128>}, {pipeline_mode = #tpu.pipeline_mode<synchronous>, transform_indices = @transform_11, window_bounds = array<i64: 2, 128, 32>}, {pipeline_mode = #tpu.pipeline_mode<synchronous>, transform_indices = @transform_12, window_bounds = array<i64: 2, 1, 32>}, {pipeline_mode = #tpu.pipeline_mode<synchronous>, transform_indices = @transform_13, window_bounds = array<i64: 1, 32>}, {pipeline_mode = #tpu.pipeline_mode<synchronous>, transform_indices = @transform_14, window_bounds = array<i64: 1, 32>}, {pipeline_mode = #tpu.pipeline_mode<synchronous>, transform_indices = @transform_15, window_bounds = array<i64: 16, 32>}]} {
    %c0 = arith.constant 0 : index
    %c0_0 = arith.constant 0 : index
    %0 = vector.load %arg1[%c0, %c0_0] : memref<16x32xf32, #tpu.memory_space<vmem>>, vector<16x32xf32>
    %c0_1 = arith.constant 0 : index
    %c0_2 = arith.constant 0 : index
    %1 = vector.load %arg2[%c0_1, %c0_2] : memref<16x32xf32, #tpu.memory_space<vmem>>, vector<16x32xf32>
    %2 = arith.addf %0, %1 : vector<16x32xf32>
    %c0_3 = arith.constant 0 : index
    %c0_4 = arith.constant 0 : index
    %c0_5 = arith.constant 0 : index
    %3 = vector.load %arg3[%c0_3, %c0_4, %c0_5] : memref<2x1x32xf32, #tpu.memory_space<vmem>>, vector<1x1x32xf32>
    %4 = vector.shape_cast %3 : vector<1x1x32xf32> to vector<1x32xf32>
    %c0_6 = arith.constant 0 : index
    %c0_7 = arith.constant 0 : index
    %c0_8 = arith.constant 0 : index
    %5 = vector.load %arg4[%c0_6, %c0_7, %c0_8] : memref<2x1x32xf32, #tpu.memory_space<vmem>>, vector<1x1x32xf32>
    %6 = vector.shape_cast %5 : vector<1x1x32xf32> to vector<1x32xf32>
    %cst = arith.constant dense<0.000000e+00> : vector<16xf32>
    %7 = vector.multi_reduction <add>, %2, %cst [1] : vector<16x32xf32> to vector<16xf32>
    %8 = vector.shape_cast %7 : vector<16xf32> to vector<16x1xf32>
    %cst_9 = arith.constant 3.200000e+01 : f32
    %9 = vector.broadcast %cst_9 : f32 to vector<16x1xf32>
    %10 = arith.divf %8, %9 : vector<16x1xf32>
    %11 = vector.broadcast %10 : vector<16x1xf32> to vector<16x32xf32>
    %12 = arith.subf %2, %11 : vector<16x32xf32>
    %13 = arith.mulf %12, %12 : vector<16x32xf32>
    %cst_10 = arith.constant dense<0.000000e+00> : vector<16xf32>
    %14 = vector.multi_reduction <add>, %13, %cst_10 [1] : vector<16x32xf32> to vector<16xf32>
    %15 = vector.shape_cast %14 : vector<16xf32> to vector<16x1xf32>
    %cst_11 = arith.constant 3.200000e+01 : f32
    %16 = vector.broadcast %cst_11 : f32 to vector<16x1xf32>
    %17 = arith.divf %15, %16 : vector<16x1xf32>
    %cst_12 = arith.constant 9.99999974E-6 : f32
    %18 = vector.broadcast %cst_12 : f32 to vector<16x1xf32>
    %19 = arith.addf %17, %18 : vector<16x1xf32>
    %20 = math.rsqrt %19 : vector<16x1xf32>
    %21 = vector.broadcast %20 : vector<16x1xf32> to vector<16x32xf32>
    %22 = arith.mulf %12, %21 : vector<16x32xf32>
    %23 = vector.broadcast %4 : vector<1x32xf32> to vector<16x32xf32>
    %24 = arith.mulf %22, %23 : vector<16x32xf32>
    %25 = vector.broadcast %6 : vector<1x32xf32> to vector<16x32xf32>
    %26 = arith.addf %24, %25 : vector<16x32xf32>
    %c0_13 = arith.constant 0 : index
    %c0_14 = arith.constant 0 : index
    %c0_15 = arith.constant 0 : index
    %27 = vector.load %arg5[%c0_13, %c0_14, %c0_15] : memref<2x32x96xf32, #tpu.memory_space<vmem>>, vector<1x32x96xf32>
    %28 = vector.shape_cast %27 : vector<1x32x96xf32> to vector<32x96xf32>
    %cst_16 = arith.constant dense<0.000000e+00> : vector<16x96xf32>
    %29 = tpu.matmul %26, %28, %cst_16 {dimension_numbers = #tpu.dot_dimension_numbers<[1], [0], [0], [1], [0, 0, 1, 1], [], []>} : vector<16x32xf32>, vector<32x96xf32>, vector<16x96xf32> -> vector<16x96xf32>
    %30 = vector.extract_strided_slice %29 {offsets = [0, 0], sizes = [16, 32], strides = [1, 1]} : vector<16x96xf32> to vector<16x32xf32>
    %cst_17 = arith.constant 0.353553385 : f32
    %31 = vector.broadcast %cst_17 : f32 to vector<16x32xf32>
    %32 = arith.mulf %30, %31 : vector<16x32xf32>
    %33 = vector.extract_strided_slice %29 {offsets = [0, 32], sizes = [16, 32], strides = [1, 1]} : vector<16x96xf32> to vector<16x32xf32>
    %34 = vector.extract_strided_slice %29 {offsets = [0, 64], sizes = [16, 32], strides = [1, 1]} : vector<16x96xf32> to vector<16x32xf32>
    %35 = vector.extract_strided_slice %32 {offsets = [0, 0], sizes = [16, 8], strides = [1, 1]} : vector<16x32xf32> to vector<16x8xf32>
    %36 = vector.shape_cast %35 : vector<16x8xf32> to vector<2x8x8xf32>
    %37 = vector.extract_strided_slice %33 {offsets = [0, 0], sizes = [16, 8], strides = [1, 1]} : vector<16x32xf32> to vector<16x8xf32>
    %38 = vector.shape_cast %37 : vector<16x8xf32> to vector<2x8x8xf32>
    %39 = vector.extract_strided_slice %34 {offsets = [0, 0], sizes = [16, 8], strides = [1, 1]} : vector<16x32xf32> to vector<16x8xf32>
    %40 = vector.shape_cast %39 : vector<16x8xf32> to vector<2x8x8xf32>
    "tpu.trace_start"() <{level = 10 : i32, message = "bqd,bkd->bqk"}> : () -> ()
    %cst_18 = arith.constant dense<0.000000e+00> : vector<2x8x8xf32>
    %41 = tpu.matmul %36, %38, %cst_18 {dimension_numbers = #tpu.dot_dimension_numbers<[2], [2], [1], [1], [0, 0, 0, 1, 1, 1], [0], [0]>} : vector<2x8x8xf32>, vector<2x8x8xf32>, vector<2x8x8xf32> -> vector<2x8x8xf32>
    "tpu.trace_stop"() : () -> ()
    %cst_19 = arith.constant dense<0xFF800000> : vector<2x8xf32>
    %42 = vector.multi_reduction <maximumf>, %41, %cst_19 [2] : vector<2x8x8xf32> to vector<2x8xf32>
    %43 = vector.shape_cast %42 : vector<2x8xf32> to vector<2x8x1xf32>
    %44 = vector.broadcast %43 : vector<2x8x1xf32> to vector<2x8x8xf32>
    %45 = arith.subf %41, %44 : vector<2x8x8xf32>
    %46 = math.exp %45 : vector<2x8x8xf32>
    %cst_20 = arith.constant dense<0.000000e+00> : vector<2x8xf32>
    %47 = vector.multi_reduction <add>, %46, %cst_20 [2] : vector<2x8x8xf32> to vector<2x8xf32>
    %48 = vector.shape_cast %47 : vector<2x8xf32> to vector<2x8x1xf32>
    %49 = tpu.reciprocal %48 {approx = true} : vector<2x8x1xf32> -> vector<2x8x1xf32>
    %50 = vector.broadcast %49 : vector<2x8x1xf32> to vector<2x8x8xf32>
    %51 = arith.mulf %46, %50 : vector<2x8x8xf32>
    "tpu.trace_start"() <{level = 10 : i32, message = "bqk,bkd->bqd"}> : () -> ()
    %cst_21 = arith.constant dense<0.000000e+00> : vector<2x8x8xf32>
    %52 = tpu.matmul %51, %40, %cst_21 {dimension_numbers = #tpu.dot_dimension_numbers<[2], [1], [1], [2], [0, 0, 0, 1, 1, 2], [0], [0]>} : vector<2x8x8xf32>, vector<2x8x8xf32>, vector<2x8x8xf32> -> vector<2x8x8xf32>
    "tpu.trace_stop"() : () -> ()
    %53 = vector.shape_cast %52 : vector<2x8x8xf32> to vector<16x8xf32>
    %54 = vector.extract_strided_slice %32 {offsets = [0, 8], sizes = [16, 8], strides = [1, 1]} : vector<16x32xf32> to vector<16x8xf32>
    %55 = vector.shape_cast %54 : vector<16x8xf32> to vector<2x8x8xf32>
    %56 = vector.extract_strided_slice %33 {offsets = [0, 8], sizes = [16, 8], strides = [1, 1]} : vector<16x32xf32> to vector<16x8xf32>
    %57 = vector.shape_cast %56 : vector<16x8xf32> to vector<2x8x8xf32>
    %58 = vector.extract_strided_slice %34 {offsets = [0, 8], sizes = [16, 8], strides = [1, 1]} : vector<16x32xf32> to vector<16x8xf32>
    %59 = vector.shape_cast %58 : vector<16x8xf32> to vector<2x8x8xf32>
    "tpu.trace_start"() <{level = 10 : i32, message = "bqd,bkd->bqk"}> : () -> ()
    %cst_22 = arith.constant dense<0.000000e+00> : vector<2x8x8xf32>
    %60 = tpu.matmul %55, %57, %cst_22 {dimension_numbers = #tpu.dot_dimension_numbers<[2], [2], [1], [1], [0, 0, 0, 1, 1, 1], [0], [0]>} : vector<2x8x8xf32>, vector<2x8x8xf32>, vector<2x8x8xf32> -> vector<2x8x8xf32>
    "tpu.trace_stop"() : () -> ()
    %cst_23 = arith.constant dense<0xFF800000> : vector<2x8xf32>
    %61 = vector.multi_reduction <maximumf>, %60, %cst_23 [2] : vector<2x8x8xf32> to vector<2x8xf32>
    %62 = vector.shape_cast %61 : vector<2x8xf32> to vector<2x8x1xf32>
    %63 = vector.broadcast %62 : vector<2x8x1xf32> to vector<2x8x8xf32>
    %64 = arith.subf %60, %63 : vector<2x8x8xf32>
    %65 = math.exp %64 : vector<2x8x8xf32>
    %cst_24 = arith.constant dense<0.000000e+00> : vector<2x8xf32>
    %66 = vector.multi_reduction <add>, %65, %cst_24 [2] : vector<2x8x8xf32> to vector<2x8xf32>
    %67 = vector.shape_cast %66 : vector<2x8xf32> to vector<2x8x1xf32>
    %68 = tpu.reciprocal %67 {approx = true} : vector<2x8x1xf32> -> vector<2x8x1xf32>
    %69 = vector.broadcast %68 : vector<2x8x1xf32> to vector<2x8x8xf32>
    %70 = arith.mulf %65, %69 : vector<2x8x8xf32>
    "tpu.trace_start"() <{level = 10 : i32, message = "bqk,bkd->bqd"}> : () -> ()
    %cst_25 = arith.constant dense<0.000000e+00> : vector<2x8x8xf32>
    %71 = tpu.matmul %70, %59, %cst_25 {dimension_numbers = #tpu.dot_dimension_numbers<[2], [1], [1], [2], [0, 0, 0, 1, 1, 2], [0], [0]>} : vector<2x8x8xf32>, vector<2x8x8xf32>, vector<2x8x8xf32> -> vector<2x8x8xf32>
    "tpu.trace_stop"() : () -> ()
    %72 = vector.shape_cast %71 : vector<2x8x8xf32> to vector<16x8xf32>
    %73 = vector.extract_strided_slice %32 {offsets = [0, 16], sizes = [16, 8], strides = [1, 1]} : vector<16x32xf32> to vector<16x8xf32>
    %74 = vector.shape_cast %73 : vector<16x8xf32> to vector<2x8x8xf32>
    %75 = vector.extract_strided_slice %33 {offsets = [0, 16], sizes = [16, 8], strides = [1, 1]} : vector<16x32xf32> to vector<16x8xf32>
    %76 = vector.shape_cast %75 : vector<16x8xf32> to vector<2x8x8xf32>
    %77 = vector.extract_strided_slice %34 {offsets = [0, 16], sizes = [16, 8], strides = [1, 1]} : vector<16x32xf32> to vector<16x8xf32>
    %78 = vector.shape_cast %77 : vector<16x8xf32> to vector<2x8x8xf32>
    "tpu.trace_start"() <{level = 10 : i32, message = "bqd,bkd->bqk"}> : () -> ()
    %cst_26 = arith.constant dense<0.000000e+00> : vector<2x8x8xf32>
    %79 = tpu.matmul %74, %76, %cst_26 {dimension_numbers = #tpu.dot_dimension_numbers<[2], [2], [1], [1], [0, 0, 0, 1, 1, 1], [0], [0]>} : vector<2x8x8xf32>, vector<2x8x8xf32>, vector<2x8x8xf32> -> vector<2x8x8xf32>
    "tpu.trace_stop"() : () -> ()
    %cst_27 = arith.constant dense<0xFF800000> : vector<2x8xf32>
    %80 = vector.multi_reduction <maximumf>, %79, %cst_27 [2] : vector<2x8x8xf32> to vector<2x8xf32>
    %81 = vector.shape_cast %80 : vector<2x8xf32> to vector<2x8x1xf32>
    %82 = vector.broadcast %81 : vector<2x8x1xf32> to vector<2x8x8xf32>
    %83 = arith.subf %79, %82 : vector<2x8x8xf32>
    %84 = math.exp %83 : vector<2x8x8xf32>
    %cst_28 = arith.constant dense<0.000000e+00> : vector<2x8xf32>
    %85 = vector.multi_reduction <add>, %84, %cst_28 [2] : vector<2x8x8xf32> to vector<2x8xf32>
    %86 = vector.shape_cast %85 : vector<2x8xf32> to vector<2x8x1xf32>
    %87 = tpu.reciprocal %86 {approx = true} : vector<2x8x1xf32> -> vector<2x8x1xf32>
    %88 = vector.broadcast %87 : vector<2x8x1xf32> to vector<2x8x8xf32>
    %89 = arith.mulf %84, %88 : vector<2x8x8xf32>
    "tpu.trace_start"() <{level = 10 : i32, message = "bqk,bkd->bqd"}> : () -> ()
    %cst_29 = arith.constant dense<0.000000e+00> : vector<2x8x8xf32>
    %90 = tpu.matmul %89, %78, %cst_29 {dimension_numbers = #tpu.dot_dimension_numbers<[2], [1], [1], [2], [0, 0, 0, 1, 1, 2], [0], [0]>} : vector<2x8x8xf32>, vector<2x8x8xf32>, vector<2x8x8xf32> -> vector<2x8x8xf32>
    "tpu.trace_stop"() : () -> ()
    %91 = vector.shape_cast %90 : vector<2x8x8xf32> to vector<16x8xf32>
    %92 = vector.extract_strided_slice %32 {offsets = [0, 24], sizes = [16, 8], strides = [1, 1]} : vector<16x32xf32> to vector<16x8xf32>
    %93 = vector.shape_cast %92 : vector<16x8xf32> to vector<2x8x8xf32>
    %94 = vector.extract_strided_slice %33 {offsets = [0, 24], sizes = [16, 8], strides = [1, 1]} : vector<16x32xf32> to vector<16x8xf32>
    %95 = vector.shape_cast %94 : vector<16x8xf32> to vector<2x8x8xf32>
    %96 = vector.extract_strided_slice %34 {offsets = [0, 24], sizes = [16, 8], strides = [1, 1]} : vector<16x32xf32> to vector<16x8xf32>
    %97 = vector.shape_cast %96 : vector<16x8xf32> to vector<2x8x8xf32>
    "tpu.trace_start"() <{level = 10 : i32, message = "bqd,bkd->bqk"}> : () -> ()
    %cst_30 = arith.constant dense<0.000000e+00> : vector<2x8x8xf32>
    %98 = tpu.matmul %93, %95, %cst_30 {dimension_numbers = #tpu.dot_dimension_numbers<[2], [2], [1], [1], [0, 0, 0, 1, 1, 1], [0], [0]>} : vector<2x8x8xf32>, vector<2x8x8xf32>, vector<2x8x8xf32> -> vector<2x8x8xf32>
    "tpu.trace_stop"() : () -> ()
    %cst_31 = arith.constant dense<0xFF800000> : vector<2x8xf32>
    %99 = vector.multi_reduction <maximumf>, %98, %cst_31 [2] : vector<2x8x8xf32> to vector<2x8xf32>
    %100 = vector.shape_cast %99 : vector<2x8xf32> to vector<2x8x1xf32>
    %101 = vector.broadcast %100 : vector<2x8x1xf32> to vector<2x8x8xf32>
    %102 = arith.subf %98, %101 : vector<2x8x8xf32>
    %103 = math.exp %102 : vector<2x8x8xf32>
    %cst_32 = arith.constant dense<0.000000e+00> : vector<2x8xf32>
    %104 = vector.multi_reduction <add>, %103, %cst_32 [2] : vector<2x8x8xf32> to vector<2x8xf32>
    %105 = vector.shape_cast %104 : vector<2x8xf32> to vector<2x8x1xf32>
    %106 = tpu.reciprocal %105 {approx = true} : vector<2x8x1xf32> -> vector<2x8x1xf32>
    %107 = vector.broadcast %106 : vector<2x8x1xf32> to vector<2x8x8xf32>
    %108 = arith.mulf %103, %107 : vector<2x8x8xf32>
    "tpu.trace_start"() <{level = 10 : i32, message = "bqk,bkd->bqd"}> : () -> ()
    %cst_33 = arith.constant dense<0.000000e+00> : vector<2x8x8xf32>
    %109 = tpu.matmul %108, %97, %cst_33 {dimension_numbers = #tpu.dot_dimension_numbers<[2], [1], [1], [2], [0, 0, 0, 1, 1, 2], [0], [0]>} : vector<2x8x8xf32>, vector<2x8x8xf32>, vector<2x8x8xf32> -> vector<2x8x8xf32>
    "tpu.trace_stop"() : () -> ()
    %110 = vector.shape_cast %109 : vector<2x8x8xf32> to vector<16x8xf32>
    %111 = tpu.concatenate %53, %72, %91, %110 in 1 : vector<16x8xf32>, vector<16x8xf32>, vector<16x8xf32>, vector<16x8xf32> -> vector<16x32xf32>
    %c0_34 = arith.constant 0 : index
    %c0_35 = arith.constant 0 : index
    %c0_36 = arith.constant 0 : index
    %112 = vector.load %arg6[%c0_34, %c0_35, %c0_36] : memref<2x32x32xf32, #tpu.memory_space<vmem>>, vector<1x32x32xf32>
    %113 = vector.shape_cast %112 : vector<1x32x32xf32> to vector<32x32xf32>
    %cst_37 = arith.constant dense<0.000000e+00> : vector<16x32xf32>
    %114 = tpu.matmul %111, %113, %cst_37 {dimension_numbers = #tpu.dot_dimension_numbers<[1], [0], [0], [1], [0, 0, 1, 1], [], []>} : vector<16x32xf32>, vector<32x32xf32>, vector<16x32xf32> -> vector<16x32xf32>
    %c0_38 = arith.constant 0 : index
    %c0_39 = arith.constant 0 : index
    %c0_40 = arith.constant 0 : index
    %115 = vector.load %arg7[%c0_38, %c0_39, %c0_40] : memref<2x1x32xf32, #tpu.memory_space<vmem>>, vector<1x1x32xf32>
    %116 = vector.shape_cast %115 : vector<1x1x32xf32> to vector<1x32xf32>
    %117 = vector.broadcast %116 : vector<1x32xf32> to vector<16x32xf32>
    %118 = arith.addf %114, %117 : vector<16x32xf32>
    %119 = arith.addf %2, %118 : vector<16x32xf32>
    %c0_41 = arith.constant 0 : index
    %c0_42 = arith.constant 0 : index
    %c0_43 = arith.constant 0 : index
    %120 = vector.load %arg8[%c0_41, %c0_42, %c0_43] : memref<2x1x32xf32, #tpu.memory_space<vmem>>, vector<1x1x32xf32>
    %121 = vector.shape_cast %120 : vector<1x1x32xf32> to vector<1x32xf32>
    %c0_44 = arith.constant 0 : index
    %c0_45 = arith.constant 0 : index
    %c0_46 = arith.constant 0 : index
    %122 = vector.load %arg9[%c0_44, %c0_45, %c0_46] : memref<2x1x32xf32, #tpu.memory_space<vmem>>, vector<1x1x32xf32>
    %123 = vector.shape_cast %122 : vector<1x1x32xf32> to vector<1x32xf32>
    %cst_47 = arith.constant dense<0.000000e+00> : vector<16xf32>
    %124 = vector.multi_reduction <add>, %119, %cst_47 [1] : vector<16x32xf32> to vector<16xf32>
    %125 = vector.shape_cast %124 : vector<16xf32> to vector<16x1xf32>
    %cst_48 = arith.constant 3.200000e+01 : f32
    %126 = vector.broadcast %cst_48 : f32 to vector<16x1xf32>
    %127 = arith.divf %125, %126 : vector<16x1xf32>
    %128 = vector.broadcast %127 : vector<16x1xf32> to vector<16x32xf32>
    %129 = arith.subf %119, %128 : vector<16x32xf32>
    %130 = arith.mulf %129, %129 : vector<16x32xf32>
    %cst_49 = arith.constant dense<0.000000e+00> : vector<16xf32>
    %131 = vector.multi_reduction <add>, %130, %cst_49 [1] : vector<16x32xf32> to vector<16xf32>
    %132 = vector.shape_cast %131 : vector<16xf32> to vector<16x1xf32>
    %cst_50 = arith.constant 3.200000e+01 : f32
    %133 = vector.broadcast %cst_50 : f32 to vector<16x1xf32>
    %134 = arith.divf %132, %133 : vector<16x1xf32>
    %cst_51 = arith.constant 9.99999974E-6 : f32
    %135 = vector.broadcast %cst_51 : f32 to vector<16x1xf32>
    %136 = arith.addf %134, %135 : vector<16x1xf32>
    %137 = math.rsqrt %136 : vector<16x1xf32>
    %138 = vector.broadcast %137 : vector<16x1xf32> to vector<16x32xf32>
    %139 = arith.mulf %129, %138 : vector<16x32xf32>
    %140 = vector.broadcast %121 : vector<1x32xf32> to vector<16x32xf32>
    %141 = arith.mulf %139, %140 : vector<16x32xf32>
    %142 = vector.broadcast %123 : vector<1x32xf32> to vector<16x32xf32>
    %143 = arith.addf %141, %142 : vector<16x32xf32>
    %c0_52 = arith.constant 0 : index
    %c0_53 = arith.constant 0 : index
    %c0_54 = arith.constant 0 : index
    %144 = vector.load %arg10[%c0_52, %c0_53, %c0_54] : memref<2x32x128xf32, #tpu.memory_space<vmem>>, vector<1x32x128xf32>
    %145 = vector.shape_cast %144 : vector<1x32x128xf32> to vector<32x128xf32>
    %cst_55 = arith.constant dense<0.000000e+00> : vector<16x128xf32>
    %146 = tpu.matmul %143, %145, %cst_55 {dimension_numbers = #tpu.dot_dimension_numbers<[1], [0], [0], [1], [0, 0, 1, 1], [], []>} : vector<16x32xf32>, vector<32x128xf32>, vector<16x128xf32> -> vector<16x128xf32>
    %c0_56 = arith.constant 0 : index
    %c0_57 = arith.constant 0 : index
    %c0_58 = arith.constant 0 : index
    %147 = vector.load %arg11[%c0_56, %c0_57, %c0_58] : memref<2x1x128xf32, #tpu.memory_space<vmem>>, vector<1x1x128xf32>
    %148 = vector.shape_cast %147 : vector<1x1x128xf32> to vector<1x128xf32>
    %149 = vector.broadcast %148 : vector<1x128xf32> to vector<16x128xf32>
    %150 = arith.addf %146, %149 : vector<16x128xf32>
    %cst_59 = arith.constant 5.000000e-01 : f32
    %151 = vector.broadcast %cst_59 : f32 to vector<16x128xf32>
    %152 = arith.mulf %151, %150 : vector<16x128xf32>
    %cst_60 = arith.constant 0.707106769 : f32
    %153 = vector.broadcast %cst_60 : f32 to vector<16x128xf32>
    %154 = arith.mulf %150, %153 : vector<16x128xf32>
    %155 = math.erf %154 : vector<16x128xf32>
    %cst_61 = arith.constant 1.000000e+00 : f32
    %156 = vector.broadcast %cst_61 : f32 to vector<16x128xf32>
    %157 = arith.addf %156, %155 : vector<16x128xf32>
    %158 = arith.mulf %152, %157 : vector<16x128xf32>
    %c0_62 = arith.constant 0 : index
    %c0_63 = arith.constant 0 : index
    %c0_64 = arith.constant 0 : index
    %159 = vector.load %arg12[%c0_62, %c0_63, %c0_64] : memref<2x128x32xf32, #tpu.memory_space<vmem>>, vector<1x128x32xf32>
    %160 = vector.shape_cast %159 : vector<1x128x32xf32> to vector<128x32xf32>
    %cst_65 = arith.constant dense<0.000000e+00> : vector<16x32xf32>
    %161 = tpu.matmul %158, %160, %cst_65 {dimension_numbers = #tpu.dot_dimension_numbers<[1], [0], [0], [1], [0, 0, 1, 1], [], []>} : vector<16x128xf32>, vector<128x32xf32>, vector<16x32xf32> -> vector<16x32xf32>
    %c0_66 = arith.constant 0 : index
    %c0_67 = arith.constant 0 : index
    %c0_68 = arith.constant 0 : index
    %162 = vector.load %arg13[%c0_66, %c0_67, %c0_68] : memref<2x1x32xf32, #tpu.memory_space<vmem>>, vector<1x1x32xf32>
    %163 = vector.shape_cast %162 : vector<1x1x32xf32> to vector<1x32xf32>
    %164 = vector.broadcast %163 : vector<1x32xf32> to vector<16x32xf32>
    %165 = arith.addf %161, %164 : vector<16x32xf32>
    %166 = arith.addf %143, %165 : vector<16x32xf32>
    %c1 = arith.constant 1 : index
    %c0_69 = arith.constant 0 : index
    %c0_70 = arith.constant 0 : index
    %167 = vector.load %arg3[%c1, %c0_69, %c0_70] : memref<2x1x32xf32, #tpu.memory_space<vmem>>, vector<1x1x32xf32>
    %168 = vector.shape_cast %167 : vector<1x1x32xf32> to vector<1x32xf32>
    %c1_71 = arith.constant 1 : index
    %c0_72 = arith.constant 0 : index
    %c0_73 = arith.constant 0 : index
    %169 = vector.load %arg4[%c1_71, %c0_72, %c0_73] : memref<2x1x32xf32, #tpu.memory_space<vmem>>, vector<1x1x32xf32>
    %170 = vector.shape_cast %169 : vector<1x1x32xf32> to vector<1x32xf32>
    %cst_74 = arith.constant dense<0.000000e+00> : vector<16xf32>
    %171 = vector.multi_reduction <add>, %166, %cst_74 [1] : vector<16x32xf32> to vector<16xf32>
    %172 = vector.shape_cast %171 : vector<16xf32> to vector<16x1xf32>
    %cst_75 = arith.constant 3.200000e+01 : f32
    %173 = vector.broadcast %cst_75 : f32 to vector<16x1xf32>
    %174 = arith.divf %172, %173 : vector<16x1xf32>
    %175 = vector.broadcast %174 : vector<16x1xf32> to vector<16x32xf32>
    %176 = arith.subf %166, %175 : vector<16x32xf32>
    %177 = arith.mulf %176, %176 : vector<16x32xf32>
    %cst_76 = arith.constant dense<0.000000e+00> : vector<16xf32>
    %178 = vector.multi_reduction <add>, %177, %cst_76 [1] : vector<16x32xf32> to vector<16xf32>
    %179 = vector.shape_cast %178 : vector<16xf32> to vector<16x1xf32>
    %cst_77 = arith.constant 3.200000e+01 : f32
    %180 = vector.broadcast %cst_77 : f32 to vector<16x1xf32>
    %181 = arith.divf %179, %180 : vector<16x1xf32>
    %cst_78 = arith.constant 9.99999974E-6 : f32
    %182 = vector.broadcast %cst_78 : f32 to vector<16x1xf32>
    %183 = arith.addf %181, %182 : vector<16x1xf32>
    %184 = math.rsqrt %183 : vector<16x1xf32>
    %185 = vector.broadcast %184 : vector<16x1xf32> to vector<16x32xf32>
    %186 = arith.mulf %176, %185 : vector<16x32xf32>
    %187 = vector.broadcast %168 : vector<1x32xf32> to vector<16x32xf32>
    %188 = arith.mulf %186, %187 : vector<16x32xf32>
    %189 = vector.broadcast %170 : vector<1x32xf32> to vector<16x32xf32>
    %190 = arith.addf %188, %189 : vector<16x32xf32>
    %c1_79 = arith.constant 1 : index
    %c0_80 = arith.constant 0 : index
    %c0_81 = arith.constant 0 : index
    %191 = vector.load %arg5[%c1_79, %c0_80, %c0_81] : memref<2x32x96xf32, #tpu.memory_space<vmem>>, vector<1x32x96xf32>
    %192 = vector.shape_cast %191 : vector<1x32x96xf32> to vector<32x96xf32>
    %cst_82 = arith.constant dense<0.000000e+00> : vector<16x96xf32>
    %193 = tpu.matmul %190, %192, %cst_82 {dimension_numbers = #tpu.dot_dimension_numbers<[1], [0], [0], [1], [0, 0, 1, 1], [], []>} : vector<16x32xf32>, vector<32x96xf32>, vector<16x96xf32> -> vector<16x96xf32>
    %194 = vector.extract_strided_slice %193 {offsets = [0, 0], sizes = [16, 32], strides = [1, 1]} : vector<16x96xf32> to vector<16x32xf32>
    %cst_83 = arith.constant 0.353553385 : f32
    %195 = vector.broadcast %cst_83 : f32 to vector<16x32xf32>
    %196 = arith.mulf %194, %195 : vector<16x32xf32>
    %197 = vector.extract_strided_slice %193 {offsets = [0, 32], sizes = [16, 32], strides = [1, 1]} : vector<16x96xf32> to vector<16x32xf32>
    %198 = vector.extract_strided_slice %193 {offsets = [0, 64], sizes = [16, 32], strides = [1, 1]} : vector<16x96xf32> to vector<16x32xf32>
    %199 = vector.extract_strided_slice %196 {offsets = [0, 0], sizes = [16, 8], strides = [1, 1]} : vector<16x32xf32> to vector<16x8xf32>
    %200 = vector.shape_cast %199 : vector<16x8xf32> to vector<2x8x8xf32>
    %201 = vector.extract_strided_slice %197 {offsets = [0, 0], sizes = [16, 8], strides = [1, 1]} : vector<16x32xf32> to vector<16x8xf32>
    %202 = vector.shape_cast %201 : vector<16x8xf32> to vector<2x8x8xf32>
    %203 = vector.extract_strided_slice %198 {offsets = [0, 0], sizes = [16, 8], strides = [1, 1]} : vector<16x32xf32> to vector<16x8xf32>
    %204 = vector.shape_cast %203 : vector<16x8xf32> to vector<2x8x8xf32>
    "tpu.trace_start"() <{level = 10 : i32, message = "bqd,bkd->bqk"}> : () -> ()
    %cst_84 = arith.constant dense<0.000000e+00> : vector<2x8x8xf32>
    %205 = tpu.matmul %200, %202, %cst_84 {dimension_numbers = #tpu.dot_dimension_numbers<[2], [2], [1], [1], [0, 0, 0, 1, 1, 1], [0], [0]>} : vector<2x8x8xf32>, vector<2x8x8xf32>, vector<2x8x8xf32> -> vector<2x8x8xf32>
    "tpu.trace_stop"() : () -> ()
    %cst_85 = arith.constant dense<0xFF800000> : vector<2x8xf32>
    %206 = vector.multi_reduction <maximumf>, %205, %cst_85 [2] : vector<2x8x8xf32> to vector<2x8xf32>
    %207 = vector.shape_cast %206 : vector<2x8xf32> to vector<2x8x1xf32>
    %208 = vector.broadcast %207 : vector<2x8x1xf32> to vector<2x8x8xf32>
    %209 = arith.subf %205, %208 : vector<2x8x8xf32>
    %210 = math.exp %209 : vector<2x8x8xf32>
    %cst_86 = arith.constant dense<0.000000e+00> : vector<2x8xf32>
    %211 = vector.multi_reduction <add>, %210, %cst_86 [2] : vector<2x8x8xf32> to vector<2x8xf32>
    %212 = vector.shape_cast %211 : vector<2x8xf32> to vector<2x8x1xf32>
    %213 = tpu.reciprocal %212 {approx = true} : vector<2x8x1xf32> -> vector<2x8x1xf32>
    %214 = vector.broadcast %213 : vector<2x8x1xf32> to vector<2x8x8xf32>
    %215 = arith.mulf %210, %214 : vector<2x8x8xf32>
    "tpu.trace_start"() <{level = 10 : i32, message = "bqk,bkd->bqd"}> : () -> ()
    %cst_87 = arith.constant dense<0.000000e+00> : vector<2x8x8xf32>
    %216 = tpu.matmul %215, %204, %cst_87 {dimension_numbers = #tpu.dot_dimension_numbers<[2], [1], [1], [2], [0, 0, 0, 1, 1, 2], [0], [0]>} : vector<2x8x8xf32>, vector<2x8x8xf32>, vector<2x8x8xf32> -> vector<2x8x8xf32>
    "tpu.trace_stop"() : () -> ()
    %217 = vector.shape_cast %216 : vector<2x8x8xf32> to vector<16x8xf32>
    %218 = vector.extract_strided_slice %196 {offsets = [0, 8], sizes = [16, 8], strides = [1, 1]} : vector<16x32xf32> to vector<16x8xf32>
    %219 = vector.shape_cast %218 : vector<16x8xf32> to vector<2x8x8xf32>
    %220 = vector.extract_strided_slice %197 {offsets = [0, 8], sizes = [16, 8], strides = [1, 1]} : vector<16x32xf32> to vector<16x8xf32>
    %221 = vector.shape_cast %220 : vector<16x8xf32> to vector<2x8x8xf32>
    %222 = vector.extract_strided_slice %198 {offsets = [0, 8], sizes = [16, 8], strides = [1, 1]} : vector<16x32xf32> to vector<16x8xf32>
    %223 = vector.shape_cast %222 : vector<16x8xf32> to vector<2x8x8xf32>
    "tpu.trace_start"() <{level = 10 : i32, message = "bqd,bkd->bqk"}> : () -> ()
    %cst_88 = arith.constant dense<0.000000e+00> : vector<2x8x8xf32>
    %224 = tpu.matmul %219, %221, %cst_88 {dimension_numbers = #tpu.dot_dimension_numbers<[2], [2], [1], [1], [0, 0, 0, 1, 1, 1], [0], [0]>} : vector<2x8x8xf32>, vector<2x8x8xf32>, vector<2x8x8xf32> -> vector<2x8x8xf32>
    "tpu.trace_stop"() : () -> ()
    %cst_89 = arith.constant dense<0xFF800000> : vector<2x8xf32>
    %225 = vector.multi_reduction <maximumf>, %224, %cst_89 [2] : vector<2x8x8xf32> to vector<2x8xf32>
    %226 = vector.shape_cast %225 : vector<2x8xf32> to vector<2x8x1xf32>
    %227 = vector.broadcast %226 : vector<2x8x1xf32> to vector<2x8x8xf32>
    %228 = arith.subf %224, %227 : vector<2x8x8xf32>
    %229 = math.exp %228 : vector<2x8x8xf32>
    %cst_90 = arith.constant dense<0.000000e+00> : vector<2x8xf32>
    %230 = vector.multi_reduction <add>, %229, %cst_90 [2] : vector<2x8x8xf32> to vector<2x8xf32>
    %231 = vector.shape_cast %230 : vector<2x8xf32> to vector<2x8x1xf32>
    %232 = tpu.reciprocal %231 {approx = true} : vector<2x8x1xf32> -> vector<2x8x1xf32>
    %233 = vector.broadcast %232 : vector<2x8x1xf32> to vector<2x8x8xf32>
    %234 = arith.mulf %229, %233 : vector<2x8x8xf32>
    "tpu.trace_start"() <{level = 10 : i32, message = "bqk,bkd->bqd"}> : () -> ()
    %cst_91 = arith.constant dense<0.000000e+00> : vector<2x8x8xf32>
    %235 = tpu.matmul %234, %223, %cst_91 {dimension_numbers = #tpu.dot_dimension_numbers<[2], [1], [1], [2], [0, 0, 0, 1, 1, 2], [0], [0]>} : vector<2x8x8xf32>, vector<2x8x8xf32>, vector<2x8x8xf32> -> vector<2x8x8xf32>
    "tpu.trace_stop"() : () -> ()
    %236 = vector.shape_cast %235 : vector<2x8x8xf32> to vector<16x8xf32>
    %237 = vector.extract_strided_slice %196 {offsets = [0, 16], sizes = [16, 8], strides = [1, 1]} : vector<16x32xf32> to vector<16x8xf32>
    %238 = vector.shape_cast %237 : vector<16x8xf32> to vector<2x8x8xf32>
    %239 = vector.extract_strided_slice %197 {offsets = [0, 16], sizes = [16, 8], strides = [1, 1]} : vector<16x32xf32> to vector<16x8xf32>
    %240 = vector.shape_cast %239 : vector<16x8xf32> to vector<2x8x8xf32>
    %241 = vector.extract_strided_slice %198 {offsets = [0, 16], sizes = [16, 8], strides = [1, 1]} : vector<16x32xf32> to vector<16x8xf32>
    %242 = vector.shape_cast %241 : vector<16x8xf32> to vector<2x8x8xf32>
    "tpu.trace_start"() <{level = 10 : i32, message = "bqd,bkd->bqk"}> : () -> ()
    %cst_92 = arith.constant dense<0.000000e+00> : vector<2x8x8xf32>
    %243 = tpu.matmul %238, %240, %cst_92 {dimension_numbers = #tpu.dot_dimension_numbers<[2], [2], [1], [1], [0, 0, 0, 1, 1, 1], [0], [0]>} : vector<2x8x8xf32>, vector<2x8x8xf32>, vector<2x8x8xf32> -> vector<2x8x8xf32>
    "tpu.trace_stop"() : () -> ()
    %cst_93 = arith.constant dense<0xFF800000> : vector<2x8xf32>
    %244 = vector.multi_reduction <maximumf>, %243, %cst_93 [2] : vector<2x8x8xf32> to vector<2x8xf32>
    %245 = vector.shape_cast %244 : vector<2x8xf32> to vector<2x8x1xf32>
    %246 = vector.broadcast %245 : vector<2x8x1xf32> to vector<2x8x8xf32>
    %247 = arith.subf %243, %246 : vector<2x8x8xf32>
    %248 = math.exp %247 : vector<2x8x8xf32>
    %cst_94 = arith.constant dense<0.000000e+00> : vector<2x8xf32>
    %249 = vector.multi_reduction <add>, %248, %cst_94 [2] : vector<2x8x8xf32> to vector<2x8xf32>
    %250 = vector.shape_cast %249 : vector<2x8xf32> to vector<2x8x1xf32>
    %251 = tpu.reciprocal %250 {approx = true} : vector<2x8x1xf32> -> vector<2x8x1xf32>
    %252 = vector.broadcast %251 : vector<2x8x1xf32> to vector<2x8x8xf32>
    %253 = arith.mulf %248, %252 : vector<2x8x8xf32>
    "tpu.trace_start"() <{level = 10 : i32, message = "bqk,bkd->bqd"}> : () -> ()
    %cst_95 = arith.constant dense<0.000000e+00> : vector<2x8x8xf32>
    %254 = tpu.matmul %253, %242, %cst_95 {dimension_numbers = #tpu.dot_dimension_numbers<[2], [1], [1], [2], [0, 0, 0, 1, 1, 2], [0], [0]>} : vector<2x8x8xf32>, vector<2x8x8xf32>, vector<2x8x8xf32> -> vector<2x8x8xf32>
    "tpu.trace_stop"() : () -> ()
    %255 = vector.shape_cast %254 : vector<2x8x8xf32> to vector<16x8xf32>
    %256 = vector.extract_strided_slice %196 {offsets = [0, 24], sizes = [16, 8], strides = [1, 1]} : vector<16x32xf32> to vector<16x8xf32>
    %257 = vector.shape_cast %256 : vector<16x8xf32> to vector<2x8x8xf32>
    %258 = vector.extract_strided_slice %197 {offsets = [0, 24], sizes = [16, 8], strides = [1, 1]} : vector<16x32xf32> to vector<16x8xf32>
    %259 = vector.shape_cast %258 : vector<16x8xf32> to vector<2x8x8xf32>
    %260 = vector.extract_strided_slice %198 {offsets = [0, 24], sizes = [16, 8], strides = [1, 1]} : vector<16x32xf32> to vector<16x8xf32>
    %261 = vector.shape_cast %260 : vector<16x8xf32> to vector<2x8x8xf32>
    "tpu.trace_start"() <{level = 10 : i32, message = "bqd,bkd->bqk"}> : () -> ()
    %cst_96 = arith.constant dense<0.000000e+00> : vector<2x8x8xf32>
    %262 = tpu.matmul %257, %259, %cst_96 {dimension_numbers = #tpu.dot_dimension_numbers<[2], [2], [1], [1], [0, 0, 0, 1, 1, 1], [0], [0]>} : vector<2x8x8xf32>, vector<2x8x8xf32>, vector<2x8x8xf32> -> vector<2x8x8xf32>
    "tpu.trace_stop"() : () -> ()
    %cst_97 = arith.constant dense<0xFF800000> : vector<2x8xf32>
    %263 = vector.multi_reduction <maximumf>, %262, %cst_97 [2] : vector<2x8x8xf32> to vector<2x8xf32>
    %264 = vector.shape_cast %263 : vector<2x8xf32> to vector<2x8x1xf32>
    %265 = vector.broadcast %264 : vector<2x8x1xf32> to vector<2x8x8xf32>
    %266 = arith.subf %262, %265 : vector<2x8x8xf32>
    %267 = math.exp %266 : vector<2x8x8xf32>
    %cst_98 = arith.constant dense<0.000000e+00> : vector<2x8xf32>
    %268 = vector.multi_reduction <add>, %267, %cst_98 [2] : vector<2x8x8xf32> to vector<2x8xf32>
    %269 = vector.shape_cast %268 : vector<2x8xf32> to vector<2x8x1xf32>
    %270 = tpu.reciprocal %269 {approx = true} : vector<2x8x1xf32> -> vector<2x8x1xf32>
    %271 = vector.broadcast %270 : vector<2x8x1xf32> to vector<2x8x8xf32>
    %272 = arith.mulf %267, %271 : vector<2x8x8xf32>
    "tpu.trace_start"() <{level = 10 : i32, message = "bqk,bkd->bqd"}> : () -> ()
    %cst_99 = arith.constant dense<0.000000e+00> : vector<2x8x8xf32>
    %273 = tpu.matmul %272, %261, %cst_99 {dimension_numbers = #tpu.dot_dimension_numbers<[2], [1], [1], [2], [0, 0, 0, 1, 1, 2], [0], [0]>} : vector<2x8x8xf32>, vector<2x8x8xf32>, vector<2x8x8xf32> -> vector<2x8x8xf32>
    "tpu.trace_stop"() : () -> ()
    %274 = vector.shape_cast %273 : vector<2x8x8xf32> to vector<16x8xf32>
    %275 = tpu.concatenate %217, %236, %255, %274 in 1 : vector<16x8xf32>, vector<16x8xf32>, vector<16x8xf32>, vector<16x8xf32> -> vector<16x32xf32>
    %c1_100 = arith.constant 1 : index
    %c0_101 = arith.constant 0 : index
    %c0_102 = arith.constant 0 : index
    %276 = vector.load %arg6[%c1_100, %c0_101, %c0_102] : memref<2x32x32xf32, #tpu.memory_space<vmem>>, vector<1x32x32xf32>
    %277 = vector.shape_cast %276 : vector<1x32x32xf32> to vector<32x32xf32>
    %cst_103 = arith.constant dense<0.000000e+00> : vector<16x32xf32>
    %278 = tpu.matmul %275, %277, %cst_103 {dimension_numbers = #tpu.dot_dimension_numbers<[1], [0], [0], [1], [0, 0, 1, 1], [], []>} : vector<16x32xf32>, vector<32x32xf32>, vector<16x32xf32> -> vector<16x32xf32>
    %c1_104 = arith.constant 1 : index
    %c0_105 = arith.constant 0 : index
    %c0_106 = arith.constant 0 : index
    %279 = vector.load %arg7[%c1_104, %c0_105, %c0_106] : memref<2x1x32xf32, #tpu.memory_space<vmem>>, vector<1x1x32xf32>
    %280 = vector.shape_cast %279 : vector<1x1x32xf32> to vector<1x32xf32>
    %281 = vector.broadcast %280 : vector<1x32xf32> to vector<16x32xf32>
    %282 = arith.addf %278, %281 : vector<16x32xf32>
    %283 = arith.addf %166, %282 : vector<16x32xf32>
    %c1_107 = arith.constant 1 : index
    %c0_108 = arith.constant 0 : index
    %c0_109 = arith.constant 0 : index
    %284 = vector.load %arg8[%c1_107, %c0_108, %c0_109] : memref<2x1x32xf32, #tpu.memory_space<vmem>>, vector<1x1x32xf32>
    %285 = vector.shape_cast %284 : vector<1x1x32xf32> to vector<1x32xf32>
    %c1_110 = arith.constant 1 : index
    %c0_111 = arith.constant 0 : index
    %c0_112 = arith.constant 0 : index
    %286 = vector.load %arg9[%c1_110, %c0_111, %c0_112] : memref<2x1x32xf32, #tpu.memory_space<vmem>>, vector<1x1x32xf32>
    %287 = vector.shape_cast %286 : vector<1x1x32xf32> to vector<1x32xf32>
    %cst_113 = arith.constant dense<0.000000e+00> : vector<16xf32>
    %288 = vector.multi_reduction <add>, %283, %cst_113 [1] : vector<16x32xf32> to vector<16xf32>
    %289 = vector.shape_cast %288 : vector<16xf32> to vector<16x1xf32>
    %cst_114 = arith.constant 3.200000e+01 : f32
    %290 = vector.broadcast %cst_114 : f32 to vector<16x1xf32>
    %291 = arith.divf %289, %290 : vector<16x1xf32>
    %292 = vector.broadcast %291 : vector<16x1xf32> to vector<16x32xf32>
    %293 = arith.subf %283, %292 : vector<16x32xf32>
    %294 = arith.mulf %293, %293 : vector<16x32xf32>
    %cst_115 = arith.constant dense<0.000000e+00> : vector<16xf32>
    %295 = vector.multi_reduction <add>, %294, %cst_115 [1] : vector<16x32xf32> to vector<16xf32>
    %296 = vector.shape_cast %295 : vector<16xf32> to vector<16x1xf32>
    %cst_116 = arith.constant 3.200000e+01 : f32
    %297 = vector.broadcast %cst_116 : f32 to vector<16x1xf32>
    %298 = arith.divf %296, %297 : vector<16x1xf32>
    %cst_117 = arith.constant 9.99999974E-6 : f32
    %299 = vector.broadcast %cst_117 : f32 to vector<16x1xf32>
    %300 = arith.addf %298, %299 : vector<16x1xf32>
    %301 = math.rsqrt %300 : vector<16x1xf32>
    %302 = vector.broadcast %301 : vector<16x1xf32> to vector<16x32xf32>
    %303 = arith.mulf %293, %302 : vector<16x32xf32>
    %304 = vector.broadcast %285 : vector<1x32xf32> to vector<16x32xf32>
    %305 = arith.mulf %303, %304 : vector<16x32xf32>
    %306 = vector.broadcast %287 : vector<1x32xf32> to vector<16x32xf32>
    %307 = arith.addf %305, %306 : vector<16x32xf32>
    %c1_118 = arith.constant 1 : index
    %c0_119 = arith.constant 0 : index
    %c0_120 = arith.constant 0 : index
    %308 = vector.load %arg10[%c1_118, %c0_119, %c0_120] : memref<2x32x128xf32, #tpu.memory_space<vmem>>, vector<1x32x128xf32>
    %309 = vector.shape_cast %308 : vector<1x32x128xf32> to vector<32x128xf32>
    %cst_121 = arith.constant dense<0.000000e+00> : vector<16x128xf32>
    %310 = tpu.matmul %307, %309, %cst_121 {dimension_numbers = #tpu.dot_dimension_numbers<[1], [0], [0], [1], [0, 0, 1, 1], [], []>} : vector<16x32xf32>, vector<32x128xf32>, vector<16x128xf32> -> vector<16x128xf32>
    %c1_122 = arith.constant 1 : index
    %c0_123 = arith.constant 0 : index
    %c0_124 = arith.constant 0 : index
    %311 = vector.load %arg11[%c1_122, %c0_123, %c0_124] : memref<2x1x128xf32, #tpu.memory_space<vmem>>, vector<1x1x128xf32>
    %312 = vector.shape_cast %311 : vector<1x1x128xf32> to vector<1x128xf32>
    %313 = vector.broadcast %312 : vector<1x128xf32> to vector<16x128xf32>
    %314 = arith.addf %310, %313 : vector<16x128xf32>
    %cst_125 = arith.constant 5.000000e-01 : f32
    %315 = vector.broadcast %cst_125 : f32 to vector<16x128xf32>
    %316 = arith.mulf %315, %314 : vector<16x128xf32>
    %cst_126 = arith.constant 0.707106769 : f32
    %317 = vector.broadcast %cst_126 : f32 to vector<16x128xf32>
    %318 = arith.mulf %314, %317 : vector<16x128xf32>
    %319 = math.erf %318 : vector<16x128xf32>
    %cst_127 = arith.constant 1.000000e+00 : f32
    %320 = vector.broadcast %cst_127 : f32 to vector<16x128xf32>
    %321 = arith.addf %320, %319 : vector<16x128xf32>
    %322 = arith.mulf %316, %321 : vector<16x128xf32>
    %c1_128 = arith.constant 1 : index
    %c0_129 = arith.constant 0 : index
    %c0_130 = arith.constant 0 : index
    %323 = vector.load %arg12[%c1_128, %c0_129, %c0_130] : memref<2x128x32xf32, #tpu.memory_space<vmem>>, vector<1x128x32xf32>
    %324 = vector.shape_cast %323 : vector<1x128x32xf32> to vector<128x32xf32>
    %cst_131 = arith.constant dense<0.000000e+00> : vector<16x32xf32>
    %325 = tpu.matmul %322, %324, %cst_131 {dimension_numbers = #tpu.dot_dimension_numbers<[1], [0], [0], [1], [0, 0, 1, 1], [], []>} : vector<16x128xf32>, vector<128x32xf32>, vector<16x32xf32> -> vector<16x32xf32>
    %c1_132 = arith.constant 1 : index
    %c0_133 = arith.constant 0 : index
    %c0_134 = arith.constant 0 : index
    %326 = vector.load %arg13[%c1_132, %c0_133, %c0_134] : memref<2x1x32xf32, #tpu.memory_space<vmem>>, vector<1x1x32xf32>
    %327 = vector.shape_cast %326 : vector<1x1x32xf32> to vector<1x32xf32>
    %328 = vector.broadcast %327 : vector<1x32xf32> to vector<16x32xf32>
    %329 = arith.addf %325, %328 : vector<16x32xf32>
    %330 = arith.addf %307, %329 : vector<16x32xf32>
    %c0_135 = arith.constant 0 : index
    %c0_136 = arith.constant 0 : index
    %331 = vector.load %arg14[%c0_135, %c0_136] : memref<1x32xf32, #tpu.memory_space<vmem>>, vector<1x32xf32>
    %c0_137 = arith.constant 0 : index
    %c0_138 = arith.constant 0 : index
    %332 = vector.load %arg15[%c0_137, %c0_138] : memref<1x32xf32, #tpu.memory_space<vmem>>, vector<1x32xf32>
    %cst_139 = arith.constant dense<0.000000e+00> : vector<16xf32>
    %333 = vector.multi_reduction <add>, %330, %cst_139 [1] : vector<16x32xf32> to vector<16xf32>
    %334 = vector.shape_cast %333 : vector<16xf32> to vector<16x1xf32>
    %cst_140 = arith.constant 3.200000e+01 : f32
    %335 = vector.broadcast %cst_140 : f32 to vector<16x1xf32>
    %336 = arith.divf %334, %335 : vector<16x1xf32>
    %337 = vector.broadcast %336 : vector<16x1xf32> to vector<16x32xf32>
    %338 = arith.subf %330, %337 : vector<16x32xf32>
    %339 = arith.mulf %338, %338 : vector<16x32xf32>
    %cst_141 = arith.constant dense<0.000000e+00> : vector<16xf32>
    %340 = vector.multi_reduction <add>, %339, %cst_141 [1] : vector<16x32xf32> to vector<16xf32>
    %341 = vector.shape_cast %340 : vector<16xf32> to vector<16x1xf32>
    %cst_142 = arith.constant 3.200000e+01 : f32
    %342 = vector.broadcast %cst_142 : f32 to vector<16x1xf32>
    %343 = arith.divf %341, %342 : vector<16x1xf32>
    %cst_143 = arith.constant 9.99999974E-6 : f32
    %344 = vector.broadcast %cst_143 : f32 to vector<16x1xf32>
    %345 = arith.addf %343, %344 : vector<16x1xf32>
    %346 = math.rsqrt %345 : vector<16x1xf32>
    %347 = vector.broadcast %346 : vector<16x1xf32> to vector<16x32xf32>
    %348 = arith.mulf %338, %347 : vector<16x32xf32>
    %349 = vector.broadcast %331 : vector<1x32xf32> to vector<16x32xf32>
    %350 = arith.mulf %348, %349 : vector<16x32xf32>
    %351 = vector.broadcast %332 : vector<1x32xf32> to vector<16x32xf32>
    %352 = arith.addf %350, %351 : vector<16x32xf32>
    %c0_144 = arith.constant 0 : index
    %c0_145 = arith.constant 0 : index
    %353 = vector.load %arg16[%c0_144, %c0_145] : memref<16x32xf32, #tpu.memory_space<vmem>>, vector<16x32xf32>
    tpu.vector_store %arg16[%c0_144, %c0_145], %352 {strides = array<i32>} : memref<16x32xf32, #tpu.memory_space<vmem>>, vector<16x32xf32>,
    return
  }
  func.func @transform_0(%arg0: i32) -> (i32, i32) {
    %c0_i32 = arith.constant 0 : i32
    %c0_i32_0 = arith.constant 0 : i32
    %c0_i32_1 = arith.constant 0 : i32
    return %c0_i32, %c0_i32_0 : i32, i32
  }
  func.func @transform_1(%arg0: i32) -> (i32, i32) {
    %c0_i32 = arith.constant 0 : i32
    %c0_i32_0 = arith.constant 0 : i32
    %c0_i32_1 = arith.constant 0 : i32
    return %c0_i32, %c0_i32_0 : i32, i32
  }
  func.func @transform_2(%arg0: i32) -> (i32, i32, i32) {
    %c0_i32 = arith.constant 0 : i32
    %c0_i32_0 = arith.constant 0 : i32
    %c0_i32_1 = arith.constant 0 : i32
    %c0_i32_2 = arith.constant 0 : i32
    return %c0_i32, %c0_i32_0, %c0_i32_1 : i32, i32, i32
  }
  func.func @transform_3(%arg0: i32) -> (i32, i32, i32) {
    %c0_i32 = arith.constant 0 : i32
    %c0_i32_0 = arith.constant 0 : i32
    %c0_i32_1 = arith.constant 0 : i32
    %c0_i32_2 = arith.constant 0 : i32
    return %c0_i32, %c0_i32_0, %c0_i32_1 : i32, i32, i32
  }
  func.func @transform_4(%arg0: i32) -> (i32, i32, i32) {
    %c0_i32 = arith.constant 0 : i32
    %c0_i32_0 = arith.constant 0 : i32
    %c0_i32_1 = arith.constant 0 : i32
    %c0_i32_2 = arith.constant 0 : i32
    return %c0_i32, %c0_i32_0, %c0_i32_1 : i32, i32, i32
  }
  func.func @transform_5(%arg0: i32) -> (i32, i32, i32) {
    %c0_i32 = arith.constant 0 : i32
    %c0_i32_0 = arith.constant 0 : i32
    %c0_i32_1 = arith.constant 0 : i32
    %c0_i32_2 = arith.constant 0 : i32
    return %c0_i32, %c0_i32_0, %c0_i32_1 : i32, i32, i32
  }
  func.func @transform_6(%arg0: i32) -> (i32, i32, i32) {
    %c0_i32 = arith.constant 0 : i32
    %c0_i32_0 = arith.constant 0 : i32
    %c0_i32_1 = arith.constant 0 : i32
    %c0_i32_2 = arith.constant 0 : i32
    return %c0_i32, %c0_i32_0, %c0_i32_1 : i32, i32, i32
  }
  func.func @transform_7(%arg0: i32) -> (i32, i32, i32) {
    %c0_i32 = arith.constant 0 : i32
    %c0_i32_0 = arith.constant 0 : i32
    %c0_i32_1 = arith.constant 0 : i32
    %c0_i32_2 = arith.constant 0 : i32
    return %c0_i32, %c0_i32_0, %c0_i32_1 : i32, i32, i32
  }
  func.func @transform_8(%arg0: i32) -> (i32, i32, i32) {
    %c0_i32 = arith.constant 0 : i32
    %c0_i32_0 = arith.constant 0 : i32
    %c0_i32_1 = arith.constant 0 : i32
    %c0_i32_2 = arith.constant 0 : i32
    return %c0_i32, %c0_i32_0, %c0_i32_1 : i32, i32, i32
  }
  func.func @transform_9(%arg0: i32) -> (i32, i32, i32) {
    %c0_i32 = arith.constant 0 : i32
    %c0_i32_0 = arith.constant 0 : i32
    %c0_i32_1 = arith.constant 0 : i32
    %c0_i32_2 = arith.constant 0 : i32
    return %c0_i32, %c0_i32_0, %c0_i32_1 : i32, i32, i32
  }
  func.func @transform_10(%arg0: i32) -> (i32, i32, i32) {
    %c0_i32 = arith.constant 0 : i32
    %c0_i32_0 = arith.constant 0 : i32
    %c0_i32_1 = arith.constant 0 : i32
    %c0_i32_2 = arith.constant 0 : i32
    return %c0_i32, %c0_i32_0, %c0_i32_1 : i32, i32, i32
  }
  func.func @transform_11(%arg0: i32) -> (i32, i32, i32) {
    %c0_i32 = arith.constant 0 : i32
    %c0_i32_0 = arith.constant 0 : i32
    %c0_i32_1 = arith.constant 0 : i32
    %c0_i32_2 = arith.constant 0 : i32
    return %c0_i32, %c0_i32_0, %c0_i32_1 : i32, i32, i32
  }
  func.func @transform_12(%arg0: i32) -> (i32, i32, i32) {
    %c0_i32 = arith.constant 0 : i32
    %c0_i32_0 = arith.constant 0 : i32
    %c0_i32_1 = arith.constant 0 : i32
    %c0_i32_2 = arith.constant 0 : i32
    return %c0_i32, %c0_i32_0, %c0_i32_1 : i32, i32, i32
  }
  func.func @transform_13(%arg0: i32) -> (i32, i32) {
    %c0_i32 = arith.constant 0 : i32
    %c0_i32_0 = arith.constant 0 : i32
    %c0_i32_1 = arith.constant 0 : i32
    return %c0_i32, %c0_i32_0 : i32, i32
  }
  func.func @transform_14(%arg0: i32) -> (i32, i32) {
    %c0_i32 = arith.constant 0 : i32
    %c0_i32_0 = arith.constant 0 : i32
    %c0_i32_1 = arith.constant 0 : i32
    return %c0_i32, %c0_i32_0 : i32, i32
  }
  func.func @transform_15(%arg0: i32) -> (i32, i32) {
    %c0_i32 = arith.constant 0 : i32
    %c0_i32_0 = arith.constant 0 : i32
    %c0_i32_1 = arith.constant 0 : i32
    return %c0_i32, %c0_i32_0 : i32, i32
  }
}

</mosaic_0001>

<llo_original>
// kernel: tpu_custom_call.1
$region0: #{tpu_custom_call.1}
  #allocation0 [shape = 'u32[]', space=smem, size = 0x4, offset = 0x4, fixed_abs, tag = 'smem constant byte address 0x4 - core index']
  #allocation1 [shape = 'u32[72,128]{1,0:T(1,128)}', space=vmem, size = 0x9000, scoped, tag = 'internal scratch']
  %s0 = inlined_call_operand.vmem [shape: f32[16,32], index: 0, kind: input, shape index: {}]
  %s1 = inlined_call_operand.vmem [shape: f32[16,32], index: 1, kind: input, shape index: {}]
  %s2 = inlined_call_operand.vmem [shape: f32[2,1,32], index: 2, kind: input, shape index: {}]
  %s3 = inlined_call_operand.vmem [shape: f32[2,1,32], index: 3, kind: input, shape index: {}]
  %s4 = inlined_call_operand.vmem [shape: f32[2,32,96], index: 4, kind: input, shape index: {}]
  %s5 = inlined_call_operand.vmem [shape: f32[2,32,32], index: 5, kind: input, shape index: {}]
  %s6 = inlined_call_operand.vmem [shape: f32[2,1,32], index: 6, kind: input, shape index: {}]
  %s7 = inlined_call_operand.vmem [shape: f32[2,1,32], index: 7, kind: input, shape index: {}]
  %s8 = inlined_call_operand.vmem [shape: f32[2,1,32], index: 8, kind: input, shape index: {}]
  %s9 = inlined_call_operand.vmem [shape: f32[2,32,128], index: 9, kind: input, shape index: {}]
  %s10 = inlined_call_operand.vmem [shape: f32[2,1,128], index: 10, kind: input, shape index: {}]
  %s11 = inlined_call_operand.vmem [shape: f32[2,128,32], index: 11, kind: input, shape index: {}]
  %s12 = inlined_call_operand.vmem [shape: f32[2,1,32], index: 12, kind: input, shape index: {}]
  %s13 = inlined_call_operand.vmem [shape: f32[1,32], index: 13, kind: input, shape index: {}]
  %s14 = inlined_call_operand.vmem [shape: f32[1,32], index: 14, kind: input, shape index: {}]
  %s15 = inlined_call_operand.hbm [shape: f32[16,32], index: 15, kind: output, shape index: {}]
  %s16 = sld [smem:[#allocation0]]
  $region70: #{tpu_custom_call.1} parent=0
    _
  %s18 = ssub.s32 1, %s16
  %s19 = scalar_select 0, %s18, %s16
  $region1: #{tpu_custom_call.1} parent=0
    #allocation2 [shape = 'u8[8192]{0}', space=vmem, size = 0x2000, scoped, tag = 'output window, operand 0, single buffered']
    #allocation3 [shape = 's32[1]{0}', space=sflag, size = 0x4, scoped, tag = 'scoped memory for tpu_custom_call.1']
    %20 = vsyncpa [#allocation3], 0
    // Predicated region
    $region2: #{tpu_custom_call.1} parent=1 // pred_check
      _
    $region3: #{tpu_custom_call.1} parent=1 // pred_check_branch
      %22 = sbr.rel (0) target = $region5
    $region4: #{tpu_custom_call.1} parent=1 // pred_region
      _
    $region5: #{tpu_custom_call.1} parent=1 // pred_fallthru
      _
    // Predicated region
    $region6: #{tpu_custom_call.1} parent=1 // pred_check
      _
    $region7: #{tpu_custom_call.1} parent=1 // pred_check_branch
      %24 = sbr.rel (0) target = $region9
    $region8: #{tpu_custom_call.1} parent=1 // pred_region
      _
    $region9: #{tpu_custom_call.1} parent=1 // pred_fallthru
      _
    // Predicated region
    $region10: #{tpu_custom_call.1} parent=1 // pred_check
      _
    $region11: #{tpu_custom_call.1} parent=1 // pred_check_branch
      %26 = sbr.rel (0) target = $region13
    $region12: #{tpu_custom_call.1} parent=1 // pred_region
      _
    $region13: #{tpu_custom_call.1} parent=1 // pred_fallthru
      _
    // Predicated region
    $region14: #{tpu_custom_call.1} parent=1 // pred_check
      _
    $region15: #{tpu_custom_call.1} parent=1 // pred_check_branch
      %28 = sbr.rel (0) target = $region17
    $region16: #{tpu_custom_call.1} parent=1 // pred_region
      _
    $region17: #{tpu_custom_call.1} parent=1 // pred_fallthru
      _
    // Predicated region
    $region18: #{tpu_custom_call.1} parent=1 // pred_check
      _
    $region19: #{tpu_custom_call.1} parent=1 // pred_check_branch
      %30 = sbr.rel (0) target = $region21
    $region20: #{tpu_custom_call.1} parent=1 // pred_region
      _
    $region21: #{tpu_custom_call.1} parent=1 // pred_fallthru
      _
    // Predicated region
    $region22: #{tpu_custom_call.1} parent=1 // pred_check
      _
    $region23: #{tpu_custom_call.1} parent=1 // pred_check_branch
      %32 = sbr.rel (0) target = $region25
    $region24: #{tpu_custom_call.1} parent=1 // pred_region
      _
    $region25: #{tpu_custom_call.1} parent=1 // pred_fallthru
      _
    // Predicated region
    $region26: #{tpu_custom_call.1} parent=1 // pred_check
      _
    $region27: #{tpu_custom_call.1} parent=1 // pred_check_branch
      %34 = sbr.rel (0) target = $region29
    $region28: #{tpu_custom_call.1} parent=1 // pred_region
      _
    $region29: #{tpu_custom_call.1} parent=1 // pred_fallthru
      _
    // Predicated region
    $region30: #{tpu_custom_call.1} parent=1 // pred_check
      _
    $region31: #{tpu_custom_call.1} parent=1 // pred_check_branch
      %36 = sbr.rel (0) target = $region33
    $region32: #{tpu_custom_call.1} parent=1 // pred_region
      _
    $region33: #{tpu_custom_call.1} parent=1 // pred_fallthru
      _
    // Predicated region
    $region34: #{tpu_custom_call.1} parent=1 // pred_check
      _
    $region35: #{tpu_custom_call.1} parent=1 // pred_check_branch
      %38 = sbr.rel (0) target = $region37
    $region36: #{tpu_custom_call.1} parent=1 // pred_region
      _
    $region37: #{tpu_custom_call.1} parent=1 // pred_fallthru
      _
    // Predicated region
    $region38: #{tpu_custom_call.1} parent=1 // pred_check
      _
    $region39: #{tpu_custom_call.1} parent=1 // pred_check_branch
      %40 = sbr.rel (0) target = $region41
    $region40: #{tpu_custom_call.1} parent=1 // pred_region
      _
    $region41: #{tpu_custom_call.1} parent=1 // pred_fallthru
      _
    // Predicated region
    $region42: #{tpu_custom_call.1} parent=1 // pred_check
      _
    $region43: #{tpu_custom_call.1} parent=1 // pred_check_branch
      %42 = sbr.rel (0) target = $region45
    $region44: #{tpu_custom_call.1} parent=1 // pred_region
      _
    $region45: #{tpu_custom_call.1} parent=1 // pred_fallthru
      _
    // Predicated region
    $region46: #{tpu_custom_call.1} parent=1 // pred_check
      _
    $region47: #{tpu_custom_call.1} parent=1 // pred_check_branch
      %44 = sbr.rel (0) target = $region49
    $region48: #{tpu_custom_call.1} parent=1 // pred_region
      _
    $region49: #{tpu_custom_call.1} parent=1 // pred_fallthru
      _
    // Predicated region
    $region50: #{tpu_custom_call.1} parent=1 // pred_check
      _
    $region51: #{tpu_custom_call.1} parent=1 // pred_check_branch
      %46 = sbr.rel (0) target = $region53
    $region52: #{tpu_custom_call.1} parent=1 // pred_region
      _
    $region53: #{tpu_custom_call.1} parent=1 // pred_fallthru
      _
    // Predicated region
    $region54: #{tpu_custom_call.1} parent=1 // pred_check
      _
    $region55: #{tpu_custom_call.1} parent=1 // pred_check_branch
      %48 = sbr.rel (0) target = $region57
    $region56: #{tpu_custom_call.1} parent=1 // pred_region
      _
    $region57: #{tpu_custom_call.1} parent=1 // pred_fallthru
      _
    // Predicated region
    $region58: #{tpu_custom_call.1} parent=1 // pred_check
      _
    $region59: #{tpu_custom_call.1} parent=1 // pred_check_branch
      %50 = sbr.rel (0) target = $region61
    $region60: #{tpu_custom_call.1} parent=1 // pred_region
      _
    $region61: #{tpu_custom_call.1} parent=1 // pred_fallthru
      _
    %v51 = vld [vmem:[%s0] sm:$0xff]
    %v52 = vld [vmem:[%s0 + $0x8] sm:$0xff]
    %v53 = vld [vmem:[%s1] sm:$0xff]
    %v54 = vld [vmem:[%s1 + $0x8] sm:$0xff]
    %v55 = vadd.f32 %v51, %v53
    %v56 = vadd.f32 %v52, %v54
    %v57 = vld [vmem:[%s2] sm:$0x1]
    %v58 = vld [vmem:[%s3] sm:$0x1]
    %vm59 = vcmask 261120
    %v60 = vsel %vm59, %v55, 0.0
    %61 = vadd.xlane.f32.xlu0 %v60
    %v62 = vpop.xlane.xlu0 %61
    %v63 = vsel %vm59, %v56, 0.0
    %64 = vadd.xlane.f32.xlu0 %v63
    %v65 = vpop.xlane.xlu0 %64
    %v66 = vrcp.pop 32.0
    %v67 = vmul.f32 32.0, %v66
    %v68 = vsub.f32 1.0, %v67
    %v69 = vmul.f32 %v66, %v68
    %v70 = vadd.f32 %v66, %v69
    %vm71 = vweird.f32 %v66
    %v72 = vsel %vm71, %v66, %v70
    %v73 = vmul.f32 %v62, %v72
    %v74 = vmul.f32 %v65, %v72
    %v75 = vsub.f32 %v55, %v73
    %v76 = vsub.f32 %v56, %v74
    %v77 = vmul.f32 %v75, %v75
    %v78 = vmul.f32 %v76, %v76
    %v79 = vsel %vm59, %v77, 0.0
    %80 = vadd.xlane.f32.xlu0 %v79
    %v81 = vpop.xlane.xlu0 %80
    %v82 = vsel %vm59, %v78, 0.0
    %83 = vadd.xlane.f32.xlu0 %v82
    %v84 = vpop.xlane.xlu0 %83
    %v85 = vmul.f32 %v81, %v72
    %v86 = vmul.f32 %v84, %v72
    %v87 = vadd.f32 %v85, 1e-05
    %v88 = vadd.f32 %v86, 1e-05
    %v89 = vrsqrt.pop %v87
    %v90 = vmul.f32 %v89, %v87
    %v91 = vmul.f32 %v90, %v89
    %v92 = vmul.f32 0.5, %v91
    %v93 = vsub.f32 1.5, %v92
    %v94 = vmul.f32 %v89, %v93
    %vm95 = vweird.f32 %v87
    %vm96 = vweird.f32 %v89
    %vm97 = vmor %vm95, %vm96
    %v98 = vsel %vm97, %v89, %v94
    %v99 = vrsqrt.pop %v88
    %v100 = vmul.f32 %v99, %v88
    %v101 = vmul.f32 %v100, %v99
    %v102 = vmul.f32 0.5, %v101
    %v103 = vsub.f32 1.5, %v102
    %v104 = vmul.f32 %v99, %v103
    %vm105 = vweird.f32 %v88
    %vm106 = vweird.f32 %v99
    %vm107 = vmor %vm105, %vm106
    %v108 = vsel %vm107, %v99, %v104
    %v109 = vmul.f32 %v75, %v98
    %v110 = vmul.f32 %v76, %v108
    %v112 = vperm.slane %v57, 0
    %v114 = vmul.f32 %v109, %v112
    %v115 = vmul.f32 %v110, %v112
    %v117 = vperm.slane %v58, 0
    %v119 = vadd.f32 %v114, %v117
    %v120 = vadd.f32 %v115, %v117
    %v121 = vld [vmem:[%s4] sm:$0xff]
    %v122 = vld [vmem:[%s4 + $0x8] sm:$0xff]
    %v123 = vld [vmem:[%s4 + $0x10] sm:$0xff]
    %v124 = vld [vmem:[%s4 + $0x18] sm:$0xff]
    %v126 = vsel %vm59, %v119, 0
    %v129 = vsel %vm59, %v120, 0
    %131 = vmatpush.msra.mxu0 0.0
    %132 = vmatpush.msra.mxu0 0.0
    %133 = vmatpush.msra.mxu0 0.0
    %134 = vmatpush.msra.mxu0 0.0
    %135 = vmatpush.msra.mxu0 0.0
    %136 = vmatpush.msra.mxu0 0.0
    %137 = vmatpush.msra.mxu0 0.0
    %138 = vmatpush.msra.mxu0 0.0
    %139 = vmatpush.msra.mxu0 0.0
    %140 = vmatpush.msra.mxu0 0.0
    %141 = vmatpush.msra.mxu0 0.0
    %142 = vmatpush.msra.mxu0 0.0
    %143 = vmatpush.msra.mxu0 %v124
    %144 = vmatpush.msra.mxu0 %v123
    %145 = vmatpush.msra.mxu0 %v122
    %146 = vmatpush.msra.mxu0 %v121
    %147 = vmatmul.f32.gmra.mxu0 %v126
    %v148 = vpop.f32.mrf.mxu0
    %v149 = vadd.f32 0.0, %v148
    %150 = vmatmul.f32.gmra.mxu0 %v129
    %v151 = vpop.f32.mrf.mxu0
    %v152 = vadd.f32 0.0, %v151
    %153 = vdwg.mxu0
    %v154 = vmul.f32 %v149, 0.35355338
    %v155 = vmul.f32 %v152, 0.35355338
    %157 = vrot.lane.b32.xlu0 %v149, 96
    %v158 = vpop.permute.xlu0 %157
    %vm159 = vcmask 64512
    %v161 = vsel %vm159, %v154, 0
    %v163 = vsel %vm159, %v158, 0
    %165 = vmatpush.xpose.msra.mxu0 0.0
    %166 = vmatpush.xpose.msra.mxu0 0.0
    %167 = vmatpush.xpose.msra.mxu0 0.0
    %168 = vmatpush.xpose.msra.mxu0 0.0
    %169 = vmatpush.xpose.msra.mxu0 0.0
    %170 = vmatpush.xpose.msra.mxu0 0.0
    %171 = vmatpush.xpose.msra.mxu0 0.0
    %172 = vmatpush.xpose.msra.mxu0 0.0
    %173 = vmatpush.xpose.msra.mxu0 0.0
    %174 = vmatpush.xpose.msra.mxu0 0.0
    %175 = vmatpush.xpose.msra.mxu0 0.0
    %176 = vmatpush.xpose.msra.mxu0 0.0
    %177 = vmatpush.xpose.msra.mxu0 0.0
    %178 = vmatpush.xpose.msra.mxu0 0.0
    %179 = vmatpush.xpose.msra.mxu0 0.0
    %180 = vmatpush.xpose.msra.mxu0 %v163
    %181 = vmatmul.f32.gmra.mxu0 %v161
    %v182 = vpop.f32.mrf.mxu0
    %v183 = vadd.f32 0.0, %v182
    %184 = vdwg.mxu0
    %186 = vrot.lane.b32.xlu0 %v152, 96
    %v187 = vpop.permute.xlu0 %186
    %v189 = vsel %vm159, %v155, 0
    %v191 = vsel %vm159, %v187, 0
    %193 = vmatpush.xpose.msra.mxu0 0.0
    %194 = vmatpush.xpose.msra.mxu0 0.0
    %195 = vmatpush.xpose.msra.mxu0 0.0
    %196 = vmatpush.xpose.msra.mxu0 0.0
    %197 = vmatpush.xpose.msra.mxu0 0.0
    %198 = vmatpush.xpose.msra.mxu0 0.0
    %199 = vmatpush.xpose.msra.mxu0 0.0
    %200 = vmatpush.xpose.msra.mxu0 0.0
    %201 = vmatpush.xpose.msra.mxu0 0.0
    %202 = vmatpush.xpose.msra.mxu0 0.0
    %203 = vmatpush.xpose.msra.mxu0 0.0
    %204 = vmatpush.xpose.msra.mxu0 0.0
    %205 = vmatpush.xpose.msra.mxu0 0.0
    %206 = vmatpush.xpose.msra.mxu0 0.0
    %207 = vmatpush.xpose.msra.mxu0 0.0
    %208 = vmatpush.xpose.msra.mxu0 %v191
    %209 = vmatmul.f32.gmra.mxu0 %v189
    %v210 = vpop.f32.mrf.mxu0
    %v211 = vadd.f32 0.0, %v210
    %212 = vdwg.mxu0
    %v213 = vsel %vm159, %v183, -inf
    %214 = vmax.xlane.f32.xlu0 %v213
    %v215 = vpop.xlane.xlu0 %214
    %v216 = vsel %vm159, %v211, -inf
    %217 = vmax.xlane.f32.xlu0 %v216
    %v218 = vpop.xlane.xlu0 %217
    %v219 = vsub.f32 %v183, %v215
    %v220 = vsub.f32 %v211, %v218
    %v221 = vmul.f32 %v219, 1.442695
    %v222 = vpow.pop %v221
    %v223 = vmul.f32 %v220, 1.442695
    %v224 = vpow.pop %v223
    %v225 = vsel %vm159, %v222, 0.0
    %226 = vadd.xlane.f32.xlu0 %v225
    %v227 = vpop.xlane.xlu0 %226
    %v228 = vsel %vm159, %v224, 0.0
    %229 = vadd.xlane.f32.xlu0 %v228
    %v230 = vpop.xlane.xlu0 %229
    %v231 = vrcp.pop %v227
    %v232 = vrcp.pop %v230
    %v233 = vmul.f32 %v222, %v231
    %v234 = vmul.f32 %v224, %v232
    %235 = vrot.lane.b32.xlu0 %v149, 64
    %v236 = vpop.permute.xlu0 %235
    %v239 = vsel %vm159, %v233, 0
    %241 = vmatpush.msra.mxu0 0.0
    %242 = vmatpush.msra.mxu0 0.0
    %243 = vmatpush.msra.mxu0 0.0
    %244 = vmatpush.msra.mxu0 0.0
    %245 = vmatpush.msra.mxu0 0.0
    %246 = vmatpush.msra.mxu0 0.0
    %247 = vmatpush.msra.mxu0 0.0
    %248 = vmatpush.msra.mxu0 0.0
    %249 = vmatpush.msra.mxu0 0.0
    %250 = vmatpush.msra.mxu0 0.0
    %251 = vmatpush.msra.mxu0 0.0
    %252 = vmatpush.msra.mxu0 0.0
    %253 = vmatpush.msra.mxu0 0.0
    %254 = vmatpush.msra.mxu0 0.0
    %255 = vmatpush.msra.mxu0 0.0
    %256 = vmatpush.msra.mxu0 %v236
    %257 = vmatmul.f32.gmra.mxu0 %v239
    %v258 = vpop.f32.mrf.mxu0
    %v259 = vadd.f32 0.0, %v258
    %260 = vdwg.mxu0
    %261 = vrot.lane.b32.xlu0 %v152, 64
    %v262 = vpop.permute.xlu0 %261
    %v265 = vsel %vm159, %v234, 0
    %267 = vmatpush.msra.mxu0 0.0
    %268 = vmatpush.msra.mxu0 0.0
    %269 = vmatpush.msra.mxu0 0.0
    %270 = vmatpush.msra.mxu0 0.0
    %271 = vmatpush.msra.mxu0 0.0
    %272 = vmatpush.msra.mxu0 0.0
    %273 = vmatpush.msra.mxu0 0.0
    %274 = vmatpush.msra.mxu0 0.0
    %275 = vmatpush.msra.mxu0 0.0
    %276 = vmatpush.msra.mxu0 0.0
    %277 = vmatpush.msra.mxu0 0.0
    %278 = vmatpush.msra.mxu0 0.0
    %279 = vmatpush.msra.mxu0 0.0
    %280 = vmatpush.msra.mxu0 0.0
    %281 = vmatpush.msra.mxu0 0.0
    %282 = vmatpush.msra.mxu0 %v262
    %283 = vmatmul.f32.gmra.mxu0 %v265
    %v284 = vpop.f32.mrf.mxu0
    %v285 = vadd.f32 0.0, %v284
    %286 = vdwg.mxu0
    %287 = vrot.lane.b32.xlu0 %v154, 120
    %v288 = vpop.permute.xlu0 %287
    %289 = vrot.lane.b32.xlu0 %v149, 88
    %v290 = vpop.permute.xlu0 %289
    %v291 = vsel %vm159, %v288, 0
    %v293 = vsel %vm159, %v290, 0
    %295 = vmatpush.xpose.msra.mxu0 0.0
    %296 = vmatpush.xpose.msra.mxu0 0.0
    %297 = vmatpush.xpose.msra.mxu0 0.0
    %298 = vmatpush.xpose.msra.mxu0 0.0
    %299 = vmatpush.xpose.msra.mxu0 0.0
    %300 = vmatpush.xpose.msra.mxu0 0.0
    %301 = vmatpush.xpose.msra.mxu0 0.0
    %302 = vmatpush.xpose.msra.mxu0 0.0
    %303 = vmatpush.xpose.msra.mxu0 0.0
    %304 = vmatpush.xpose.msra.mxu0 0.0
    %305 = vmatpush.xpose.msra.mxu0 0.0
    %306 = vmatpush.xpose.msra.mxu0 0.0
    %307 = vmatpush.xpose.msra.mxu0 0.0
    %308 = vmatpush.xpose.msra.mxu0 0.0
    %309 = vmatpush.xpose.msra.mxu0 0.0
    %310 = vmatpush.xpose.msra.mxu0 %v293
    %311 = vmatmul.f32.gmra.mxu0 %v291
    %v312 = vpop.f32.mrf.mxu0
    %v313 = vadd.f32 0.0, %v312
    %314 = vdwg.mxu0
    %315 = vrot.lane.b32.xlu0 %v155, 120
    %v316 = vpop.permute.xlu0 %315
    %317 = vrot.lane.b32.xlu0 %v152, 88
    %v318 = vpop.permute.xlu0 %317
    %v319 = vsel %vm159, %v316, 0
    %v321 = vsel %vm159, %v318, 0
    %323 = vmatpush.xpose.msra.mxu0 0.0
    %324 = vmatpush.xpose.msra.mxu0 0.0
    %325 = vmatpush.xpose.msra.mxu0 0.0
    %326 = vmatpush.xpose.msra.mxu0 0.0
    %327 = vmatpush.xpose.msra.mxu0 0.0
    %328 = vmatpush.xpose.msra.mxu0 0.0
    %329 = vmatpush.xpose.msra.mxu0 0.0
    %330 = vmatpush.xpose.msra.mxu0 0.0
    %331 = vmatpush.xpose.msra.mxu0 0.0
    %332 = vmatpush.xpose.msra.mxu0 0.0
    %333 = vmatpush.xpose.msra.mxu0 0.0
    %334 = vmatpush.xpose.msra.mxu0 0.0
    %335 = vmatpush.xpose.msra.mxu0 0.0
    %336 = vmatpush.xpose.msra.mxu0 0.0
    %337 = vmatpush.xpose.msra.mxu0 0.0
    %338 = vmatpush.xpose.msra.mxu0 %v321
    %339 = vmatmul.f32.gmra.mxu0 %v319
    %v340 = vpop.f32.mrf.mxu0
    %v341 = vadd.f32 0.0, %v340
    %342 = vdwg.mxu0
    %v343 = vsel %vm159, %v313, -inf
    %344 = vmax.xlane.f32.xlu0 %v343
    %v345 = vpop.xlane.xlu0 %344
    %v346 = vsel %vm159, %v341, -inf
    %347 = vmax.xlane.f32.xlu0 %v346
    %v348 = vpop.xlane.xlu0 %347
    %v349 = vsub.f32 %v313, %v345
    %v350 = vsub.f32 %v341, %v348
    %v351 = vmul.f32 %v349, 1.442695
    %v352 = vpow.pop %v351
    %v353 = vmul.f32 %v350, 1.442695
    %v354 = vpow.pop %v353
    %v355 = vsel %vm159, %v352, 0.0
    %356 = vadd.xlane.f32.xlu0 %v355
    %v357 = vpop.xlane.xlu0 %356
    %v358 = vsel %vm159, %v354, 0.0
    %359 = vadd.xlane.f32.xlu0 %v358
    %v360 = vpop.xlane.xlu0 %359
    %v361 = vrcp.pop %v357
    %v362 = vrcp.pop %v360
    %v363 = vmul.f32 %v352, %v361
    %v364 = vmul.f32 %v354, %v362
    %365 = vrot.lane.b32.xlu0 %v149, 56
    %v366 = vpop.permute.xlu0 %365
    %v369 = vsel %vm159, %v363, 0
    %371 = vmatpush.msra.mxu0 0.0
    %372 = vmatpush.msra.mxu0 0.0
    %373 = vmatpush.msra.mxu0 0.0
    %374 = vmatpush.msra.mxu0 0.0
    %375 = vmatpush.msra.mxu0 0.0
    %376 = vmatpush.msra.mxu0 0.0
    %377 = vmatpush.msra.mxu0 0.0
    %378 = vmatpush.msra.mxu0 0.0
    %379 = vmatpush.msra.mxu0 0.0
    %380 = vmatpush.msra.mxu0 0.0
    %381 = vmatpush.msra.mxu0 0.0
    %382 = vmatpush.msra.mxu0 0.0
    %383 = vmatpush.msra.mxu0 0.0
    %384 = vmatpush.msra.mxu0 0.0
    %385 = vmatpush.msra.mxu0 0.0
    %386 = vmatpush.msra.mxu0 %v366
    %387 = vmatmul.f32.gmra.mxu0 %v369
    %v388 = vpop.f32.mrf.mxu0
    %v389 = vadd.f32 0.0, %v388
    %390 = vdwg.mxu0
    %391 = vrot.lane.b32.xlu0 %v152, 56
    %v392 = vpop.permute.xlu0 %391
    %v395 = vsel %vm159, %v364, 0
    %397 = vmatpush.msra.mxu0 0.0
    %398 = vmatpush.msra.mxu0 0.0
    %399 = vmatpush.msra.mxu0 0.0
    %400 = vmatpush.msra.mxu0 0.0
    %401 = vmatpush.msra.mxu0 0.0
    %402 = vmatpush.msra.mxu0 0.0
    %403 = vmatpush.msra.mxu0 0.0
    %404 = vmatpush.msra.mxu0 0.0
    %405 = vmatpush.msra.mxu0 0.0
    %406 = vmatpush.msra.mxu0 0.0
    %407 = vmatpush.msra.mxu0 0.0
    %408 = vmatpush.msra.mxu0 0.0
    %409 = vmatpush.msra.mxu0 0.0
    %410 = vmatpush.msra.mxu0 0.0
    %411 = vmatpush.msra.mxu0 0.0
    %412 = vmatpush.msra.mxu0 %v392
    %413 = vmatmul.f32.gmra.mxu0 %v395
    %v414 = vpop.f32.mrf.mxu0
    %v415 = vadd.f32 0.0, %v414
    %416 = vdwg.mxu0
    %417 = vrot.lane.b32.xlu0 %v154, 112
    %v418 = vpop.permute.xlu0 %417
    %419 = vrot.lane.b32.xlu0 %v149, 80
    %v420 = vpop.permute.xlu0 %419
    %v421 = vsel %vm159, %v418, 0
    %v423 = vsel %vm159, %v420, 0
    %425 = vmatpush.xpose.msra.mxu0 0.0
    %426 = vmatpush.xpose.msra.mxu0 0.0
    %427 = vmatpush.xpose.msra.mxu0 0.0
    %428 = vmatpush.xpose.msra.mxu0 0.0
    %429 = vmatpush.xpose.msra.mxu0 0.0
    %430 = vmatpush.xpose.msra.mxu0 0.0
    %431 = vmatpush.xpose.msra.mxu0 0.0
    %432 = vmatpush.xpose.msra.mxu0 0.0
    %433 = vmatpush.xpose.msra.mxu0 0.0
    %434 = vmatpush.xpose.msra.mxu0 0.0
    %435 = vmatpush.xpose.msra.mxu0 0.0
    %436 = vmatpush.xpose.msra.mxu0 0.0
    %437 = vmatpush.xpose.msra.mxu0 0.0
    %438 = vmatpush.xpose.msra.mxu0 0.0
    %439 = vmatpush.xpose.msra.mxu0 0.0
    %440 = vmatpush.xpose.msra.mxu0 %v423
    %441 = vmatmul.f32.gmra.mxu0 %v421
    %v442 = vpop.f32.mrf.mxu0
    %v443 = vadd.f32 0.0, %v442
    %444 = vdwg.mxu0
    %445 = vrot.lane.b32.xlu0 %v155, 112
    %v446 = vpop.permute.xlu0 %445
    %447 = vrot.lane.b32.xlu0 %v152, 80
    %v448 = vpop.permute.xlu0 %447
    %v449 = vsel %vm159, %v446, 0
    %v451 = vsel %vm159, %v448, 0
    %453 = vmatpush.xpose.msra.mxu0 0.0
    %454 = vmatpush.xpose.msra.mxu0 0.0
    %455 = vmatpush.xpose.msra.mxu0 0.0
    %456 = vmatpush.xpose.msra.mxu0 0.0
    %457 = vmatpush.xpose.msra.mxu0 0.0
    %458 = vmatpush.xpose.msra.mxu0 0.0
    %459 = vmatpush.xpose.msra.mxu0 0.0
    %460 = vmatpush.xpose.msra.mxu0 0.0
    %461 = vmatpush.xpose.msra.mxu0 0.0
    %462 = vmatpush.xpose.msra.mxu0 0.0
    %463 = vmatpush.xpose.msra.mxu0 0.0
    %464 = vmatpush.xpose.msra.mxu0 0.0
    %465 = vmatpush.xpose.msra.mxu0 0.0
    %466 = vmatpush.xpose.msra.mxu0 0.0
    %467 = vmatpush.xpose.msra.mxu0 0.0
    %468 = vmatpush.xpose.msra.mxu0 %v451
    %469 = vmatmul.f32.gmra.mxu0 %v449
    %v470 = vpop.f32.mrf.mxu0
    %v471 = vadd.f32 0.0, %v470
    %472 = vdwg.mxu0
    %v473 = vsel %vm159, %v443, -inf
    %474 = vmax.xlane.f32.xlu0 %v473
    %v475 = vpop.xlane.xlu0 %474
    %v476 = vsel %vm159, %v471, -inf
    %477 = vmax.xlane.f32.xlu0 %v476
    %v478 = vpop.xlane.xlu0 %477
    %v479 = vsub.f32 %v443, %v475
    %v480 = vsub.f32 %v471, %v478
    %v481 = vmul.f32 %v479, 1.442695
    %v482 = vpow.pop %v481
    %v483 = vmul.f32 %v480, 1.442695
    %v484 = vpow.pop %v483
    %v485 = vsel %vm159, %v482, 0.0
    %486 = vadd.xlane.f32.xlu0 %v485
    %v487 = vpop.xlane.xlu0 %486
    %v488 = vsel %vm159, %v484, 0.0
    %489 = vadd.xlane.f32.xlu0 %v488
    %v490 = vpop.xlane.xlu0 %489
    %v491 = vrcp.pop %v487
    %v492 = vrcp.pop %v490
    %v493 = vmul.f32 %v482, %v491
    %v494 = vmul.f32 %v484, %v492
    %495 = vrot.lane.b32.xlu0 %v149, 48
    %v496 = vpop.permute.xlu0 %495
    %v499 = vsel %vm159, %v493, 0
    %501 = vmatpush.msra.mxu0 0.0
    %502 = vmatpush.msra.mxu0 0.0
    %503 = vmatpush.msra.mxu0 0.0
    %504 = vmatpush.msra.mxu0 0.0
    %505 = vmatpush.msra.mxu0 0.0
    %506 = vmatpush.msra.mxu0 0.0
    %507 = vmatpush.msra.mxu0 0.0
    %508 = vmatpush.msra.mxu0 0.0
    %509 = vmatpush.msra.mxu0 0.0
    %510 = vmatpush.msra.mxu0 0.0
    %511 = vmatpush.msra.mxu0 0.0
    %512 = vmatpush.msra.mxu0 0.0
    %513 = vmatpush.msra.mxu0 0.0
    %514 = vmatpush.msra.mxu0 0.0
    %515 = vmatpush.msra.mxu0 0.0
    %516 = vmatpush.msra.mxu0 %v496
    %517 = vmatmul.f32.gmra.mxu0 %v499
    %v518 = vpop.f32.mrf.mxu0
    %v519 = vadd.f32 0.0, %v518
    %520 = vdwg.mxu0
    %521 = vrot.lane.b32.xlu0 %v152, 48
    %v522 = vpop.permute.xlu0 %521
    %v525 = vsel %vm159, %v494, 0
    %527 = vmatpush.msra.mxu0 0.0
    %528 = vmatpush.msra.mxu0 0.0
    %529 = vmatpush.msra.mxu0 0.0
    %530 = vmatpush.msra.mxu0 0.0
    %531 = vmatpush.msra.mxu0 0.0
    %532 = vmatpush.msra.mxu0 0.0
    %533 = vmatpush.msra.mxu0 0.0
    %534 = vmatpush.msra.mxu0 0.0
    %535 = vmatpush.msra.mxu0 0.0
    %536 = vmatpush.msra.mxu0 0.0
    %537 = vmatpush.msra.mxu0 0.0
    %538 = vmatpush.msra.mxu0 0.0
    %539 = vmatpush.msra.mxu0 0.0
    %540 = vmatpush.msra.mxu0 0.0
    %541 = vmatpush.msra.mxu0 0.0
    %542 = vmatpush.msra.mxu0 %v522
    %543 = vmatmul.f32.gmra.mxu0 %v525
    %v544 = vpop.f32.mrf.mxu0
    %v545 = vadd.f32 0.0, %v544
    %546 = vdwg.mxu0
    %547 = vrot.lane.b32.xlu0 %v154, 104
    %v548 = vpop.permute.xlu0 %547
    %549 = vrot.lane.b32.xlu0 %v149, 72
    %v550 = vpop.permute.xlu0 %549
    %v551 = vsel %vm159, %v548, 0
    %v553 = vsel %vm159, %v550, 0
    %555 = vmatpush.xpose.msra.mxu0 0.0
    %556 = vmatpush.xpose.msra.mxu0 0.0
    %557 = vmatpush.xpose.msra.mxu0 0.0
    %558 = vmatpush.xpose.msra.mxu0 0.0
    %559 = vmatpush.xpose.msra.mxu0 0.0
    %560 = vmatpush.xpose.msra.mxu0 0.0
    %561 = vmatpush.xpose.msra.mxu0 0.0
    %562 = vmatpush.xpose.msra.mxu0 0.0
    %563 = vmatpush.xpose.msra.mxu0 0.0
    %564 = vmatpush.xpose.msra.mxu0 0.0
    %565 = vmatpush.xpose.msra.mxu0 0.0
    %566 = vmatpush.xpose.msra.mxu0 0.0
    %567 = vmatpush.xpose.msra.mxu0 0.0
    %568 = vmatpush.xpose.msra.mxu0 0.0
    %569 = vmatpush.xpose.msra.mxu0 0.0
    %570 = vmatpush.xpose.msra.mxu0 %v553
    %571 = vmatmul.f32.gmra.mxu0 %v551
    %v572 = vpop.f32.mrf.mxu0
    %v573 = vadd.f32 0.0, %v572
    %574 = vdwg.mxu0
    %575 = vrot.lane.b32.xlu0 %v155, 104
    %v576 = vpop.permute.xlu0 %575
    %577 = vrot.lane.b32.xlu0 %v152, 72
    %v578 = vpop.permute.xlu0 %577
    %v579 = vsel %vm159, %v576, 0
    %v581 = vsel %vm159, %v578, 0
    %583 = vmatpush.xpose.msra.mxu0 0.0
    %584 = vmatpush.xpose.msra.mxu0 0.0
    %585 = vmatpush.xpose.msra.mxu0 0.0
    %586 = vmatpush.xpose.msra.mxu0 0.0
    %587 = vmatpush.xpose.msra.mxu0 0.0
    %588 = vmatpush.xpose.msra.mxu0 0.0
    %589 = vmatpush.xpose.msra.mxu0 0.0
    %590 = vmatpush.xpose.msra.mxu0 0.0
    %591 = vmatpush.xpose.msra.mxu0 0.0
    %592 = vmatpush.xpose.msra.mxu0 0.0
    %593 = vmatpush.xpose.msra.mxu0 0.0
    %594 = vmatpush.xpose.msra.mxu0 0.0
    %595 = vmatpush.xpose.msra.mxu0 0.0
    %596 = vmatpush.xpose.msra.mxu0 0.0
    %597 = vmatpush.xpose.msra.mxu0 0.0
    %598 = vmatpush.xpose.msra.mxu0 %v581
    %599 = vmatmul.f32.gmra.mxu0 %v579
    %v600 = vpop.f32.mrf.mxu0
    %v601 = vadd.f32 0.0, %v600
    %602 = vdwg.mxu0
    %v603 = vsel %vm159, %v573, -inf
    %604 = vmax.xlane.f32.xlu0 %v603
    %v605 = vpop.xlane.xlu0 %604
    %v606 = vsel %vm159, %v601, -inf
    %607 = vmax.xlane.f32.xlu0 %v606
    %v608 = vpop.xlane.xlu0 %607
    %v609 = vsub.f32 %v573, %v605
    %v610 = vsub.f32 %v601, %v608
    %v611 = vmul.f32 %v609, 1.442695
    %v612 = vpow.pop %v611
    %v613 = vmul.f32 %v610, 1.442695
    %v614 = vpow.pop %v613
    %v615 = vsel %vm159, %v612, 0.0
    %616 = vadd.xlane.f32.xlu0 %v615
    %v617 = vpop.xlane.xlu0 %616
    %v618 = vsel %vm159, %v614, 0.0
    %619 = vadd.xlane.f32.xlu0 %v618
    %v620 = vpop.xlane.xlu0 %619
    %v621 = vrcp.pop %v617
    %v622 = vrcp.pop %v620
    %v623 = vmul.f32 %v612, %v621
    %v624 = vmul.f32 %v614, %v622
    %625 = vrot.lane.b32.xlu0 %v149, 40
    %v626 = vpop.permute.xlu0 %625
    %v629 = vsel %vm159, %v623, 0
    %631 = vmatpush.msra.mxu0 0.0
    %632 = vmatpush.msra.mxu0 0.0
    %633 = vmatpush.msra.mxu0 0.0
    %634 = vmatpush.msra.mxu0 0.0
    %635 = vmatpush.msra.mxu0 0.0
    %636 = vmatpush.msra.mxu0 0.0
    %637 = vmatpush.msra.mxu0 0.0
    %638 = vmatpush.msra.mxu0 0.0
    %639 = vmatpush.msra.mxu0 0.0
    %640 = vmatpush.msra.mxu0 0.0
    %641 = vmatpush.msra.mxu0 0.0
    %642 = vmatpush.msra.mxu0 0.0
    %643 = vmatpush.msra.mxu0 0.0
    %644 = vmatpush.msra.mxu0 0.0
    %645 = vmatpush.msra.mxu0 0.0
    %646 = vmatpush.msra.mxu0 %v626
    %647 = vmatmul.f32.gmra.mxu0 %v629
    %v648 = vpop.f32.mrf.mxu0
    %v649 = vadd.f32 0.0, %v648
    %650 = vdwg.mxu0
    %651 = vrot.lane.b32.xlu0 %v152, 40
    %v652 = vpop.permute.xlu0 %651
    %v655 = vsel %vm159, %v624, 0
    %657 = vmatpush.msra.mxu0 0.0
    %658 = vmatpush.msra.mxu0 0.0
    %659 = vmatpush.msra.mxu0 0.0
    %660 = vmatpush.msra.mxu0 0.0
    %661 = vmatpush.msra.mxu0 0.0
    %662 = vmatpush.msra.mxu0 0.0
    %663 = vmatpush.msra.mxu0 0.0
    %664 = vmatpush.msra.mxu0 0.0
    %665 = vmatpush.msra.mxu0 0.0
    %666 = vmatpush.msra.mxu0 0.0
    %667 = vmatpush.msra.mxu0 0.0
    %668 = vmatpush.msra.mxu0 0.0
    %669 = vmatpush.msra.mxu0 0.0
    %670 = vmatpush.msra.mxu0 0.0
    %671 = vmatpush.msra.mxu0 0.0
    %672 = vmatpush.msra.mxu0 %v652
    %673 = vmatmul.f32.gmra.mxu0 %v655
    %v674 = vpop.f32.mrf.mxu0
    %v675 = vadd.f32 0.0, %v674
    %676 = vdwg.mxu0
    %679 = vrot.lane.b32.xlu0 %v389, 8
    %v680 = vpop.permute.xlu0 %679
    %681 = vrot.lane.b32.xlu0 %v415, 8
    %v682 = vpop.permute.xlu0 %681
    %687 = vrot.lane.b32.xlu0 %v519, 16
    %v688 = vpop.permute.xlu0 %687
    %689 = vrot.lane.b32.xlu0 %v545, 16
    %v690 = vpop.permute.xlu0 %689
    %695 = vrot.lane.b32.xlu0 %v649, 24
    %v696 = vpop.permute.xlu0 %695
    %697 = vrot.lane.b32.xlu0 %v675, 24
    %v698 = vpop.permute.xlu0 %697
    %v701 = vsel %vm159, %v259, %v680
    %v702 = vsel %vm159, %v285, %v682
    %vm703 = vcmask 130048
    %v704 = vsel %vm703, %v701, %v688
    %v705 = vsel %vm703, %v702, %v690
    %vm706 = vcmask 195584
    %v707 = vsel %vm706, %v704, %v696
    %v708 = vsel %vm706, %v705, %v698
    %v709 = vld [vmem:[%s5] sm:$0xff]
    %v710 = vld [vmem:[%s5 + $0x8] sm:$0xff]
    %v711 = vld [vmem:[%s5 + $0x10] sm:$0xff]
    %v712 = vld [vmem:[%s5 + $0x18] sm:$0xff]
    %v713 = vld [vmem:[%s6] sm:$0x1]
    %v715 = vperm.slane %v713, 0
    %v718 = vsel %vm59, %v707, 0
    %v721 = vsel %vm59, %v708, 0
    %723 = vmatpush.msra.mxu0 0.0
    %724 = vmatpush.msra.mxu0 0.0
    %725 = vmatpush.msra.mxu0 0.0
    %726 = vmatpush.msra.mxu0 0.0
    %727 = vmatpush.msra.mxu0 0.0
    %728 = vmatpush.msra.mxu0 0.0
    %729 = vmatpush.msra.mxu0 0.0
    %730 = vmatpush.msra.mxu0 0.0
    %731 = vmatpush.msra.mxu0 0.0
    %732 = vmatpush.msra.mxu0 0.0
    %733 = vmatpush.msra.mxu0 0.0
    %734 = vmatpush.msra.mxu0 0.0
    %735 = vmatpush.msra.mxu0 %v712
    %736 = vmatpush.msra.mxu0 %v711
    %737 = vmatpush.msra.mxu0 %v710
    %738 = vmatpush.msra.mxu0 %v709
    %739 = vmatmul.f32.gmra.mxu0 %v718
    %v740 = vpop.f32.mrf.mxu0
    %v741 = vadd.f32 %v715, %v740
    %742 = vmatmul.f32.gmra.mxu0 %v721
    %v743 = vpop.f32.mrf.mxu0
    %v744 = vadd.f32 %v715, %v743
    %745 = vdwg.mxu0
    %v746 = vadd.f32 %v55, %v741
    %v747 = vadd.f32 %v56, %v744
    %v748 = vld [vmem:[%s7] sm:$0x1]
    %v749 = vld [vmem:[%s8] sm:$0x1]
    %v750 = vsel %vm59, %v746, 0.0
    %751 = vadd.xlane.f32.xlu0 %v750
    %v752 = vpop.xlane.xlu0 %751
    %v753 = vsel %vm59, %v747, 0.0
    %754 = vadd.xlane.f32.xlu0 %v753
    %v755 = vpop.xlane.xlu0 %754
    %v756 = vmul.f32 %v752, %v72
    %v757 = vmul.f32 %v755, %v72
    %v758 = vsub.f32 %v746, %v756
    %v759 = vsub.f32 %v747, %v757
    %v760 = vmul.f32 %v758, %v758
    %v761 = vmul.f32 %v759, %v759
    %v762 = vsel %vm59, %v760, 0.0
    %763 = vadd.xlane.f32.xlu0 %v762
    %v764 = vpop.xlane.xlu0 %763
    %v765 = vsel %vm59, %v761, 0.0
    %766 = vadd.xlane.f32.xlu0 %v765
    %v767 = vpop.xlane.xlu0 %766
    %v768 = vmul.f32 %v764, %v72
    %v769 = vmul.f32 %v767, %v72
    %v770 = vadd.f32 %v768, 1e-05
    %v771 = vadd.f32 %v769, 1e-05
    %v772 = vrsqrt.pop %v770
    %v773 = vmul.f32 %v772, %v770
    %v774 = vmul.f32 %v773, %v772
    %v775 = vmul.f32 0.5, %v774
    %v776 = vsub.f32 1.5, %v775
    %v777 = vmul.f32 %v772, %v776
    %vm778 = vweird.f32 %v770
    %vm779 = vweird.f32 %v772
    %vm780 = vmor %vm778, %vm779
    %v781 = vsel %vm780, %v772, %v777
    %v782 = vrsqrt.pop %v771
    %v783 = vmul.f32 %v782, %v771
    %v784 = vmul.f32 %v783, %v782
    %v785 = vmul.f32 0.5, %v784
    %v786 = vsub.f32 1.5, %v785
    %v787 = vmul.f32 %v782, %v786
    %vm788 = vweird.f32 %v771
    %vm789 = vweird.f32 %v782
    %vm790 = vmor %vm788, %vm789
    %v791 = vsel %vm790, %v782, %v787
    %v792 = vmul.f32 %v758, %v781
    %v793 = vmul.f32 %v759, %v791
    %v795 = vperm.slane %v748, 0
    %v797 = vmul.f32 %v792, %v795
    %v798 = vmul.f32 %v793, %v795
    %v800 = vperm.slane %v749, 0
    %v802 = vadd.f32 %v797, %v800
    %v803 = vadd.f32 %v798, %v800
    %v804 = vld [vmem:[%s9] sm:$0xff]
    %v805 = vld [vmem:[%s9 + $0x8] sm:$0xff]
    %v806 = vld [vmem:[%s9 + $0x10] sm:$0xff]
    %v807 = vld [vmem:[%s9 + $0x18] sm:$0xff]
    %v808 = vld [vmem:[%s10] sm:$0x1]
    %v810 = vperm.slane %v808, 0
    %v813 = vsel %vm59, %v802, 0
    %v816 = vsel %vm59, %v803, 0
    %818 = vmatpush.msra.mxu0 0.0
    %819 = vmatpush.msra.mxu0 0.0
    %820 = vmatpush.msra.mxu0 0.0
    %821 = vmatpush.msra.mxu0 0.0
    %822 = vmatpush.msra.mxu0 0.0
    %823 = vmatpush.msra.mxu0 0.0
    %824 = vmatpush.msra.mxu0 0.0
    %825 = vmatpush.msra.mxu0 0.0
    %826 = vmatpush.msra.mxu0 0.0
    %827 = vmatpush.msra.mxu0 0.0
    %828 = vmatpush.msra.mxu0 0.0
    %829 = vmatpush.msra.mxu0 0.0
    %830 = vmatpush.msra.mxu0 %v807
    %831 = vmatpush.msra.mxu0 %v806
    %832 = vmatpush.msra.mxu0 %v805
    %833 = vmatpush.msra.mxu0 %v804
    %834 = vmatmul.f32.gmra.mxu0 %v813
    %v835 = vpop.f32.mrf.mxu0
    %v836 = vadd.f32 %v810, %v835
    %837 = vmatmul.f32.gmra.mxu0 %v816
    %v838 = vpop.f32.mrf.mxu0
    %v839 = vadd.f32 %v810, %v838
    %840 = vdwg.mxu0
    %v841 = vmul.f32 %v836, 0.5
    %v842 = vmul.f32 %v839, 0.5
    %v843 = vmul.f32 %v836, 0.70710677
    %v844 = vmul.f32 %v839, 0.70710677
    %v845 = vmul.f32 %v843, %v843
    %v846 = vmin.f32 16.0, %v845
    %v847 = vmul.f32 %v846, 2.1237322e-06
    %v848 = vadd.f32 %v847, 0.00028619796
    %v849 = vmul.f32 %v846, %v848
    %v850 = vadd.f32 %v849, 0.0036580483
    %v851 = vmul.f32 %v846, %v850
    %v852 = vadd.f32 %v851, 0.05243302
    %v853 = vmul.f32 %v846, %v852
    %v854 = vadd.f32 %v853, 0.18741608
    %v855 = vmul.f32 %v846, %v854
    %v856 = vadd.f32 %v855, 1.1283791
    %v857 = vmul.f32 %v843, %v856
    %v858 = vmul.f32 %v846, 3.8918573e-05
    %v859 = vadd.f32 %v858, 0.001143296
    %v860 = vmul.f32 %v846, %v859
    %v861 = vadd.f32 %v860, 0.014752088
    %v862 = vmul.f32 %v846, %v861
    %v863 = vadd.f32 %v862, 0.112945676
    %v864 = vmul.f32 %v846, %v863
    %v865 = vadd.f32 %v864, 0.4994258
    %v866 = vmul.f32 %v846, %v865
    %v867 = vadd.f32 %v866, 1.0
    %v868 = vrcp.pop %v867
    %v869 = vmul.f32 %v867, %v868
    %v870 = vsub.f32 1.0, %v869
    %v871 = vmul.f32 %v868, %v870
    %v872 = vadd.f32 %v868, %v871
    %vm873 = vweird.f32 %v867
    %vm874 = vweird.f32 %v868
    %vm875 = vmor %vm873, %vm874
    %v876 = vsel %vm875, %v868, %v872
    %v877 = vand.u32 2147483647, %v867
    %vm878 = vcmp.eq.f32.partialorder %v877, 8.507059e+37
    %v879 = vand.u32 %v867, 2147483648
    %v880 = vor.u32 1.1754944e-38, %v879
    %v881 = vsel %vm878, %v880, %v876
    %v882 = vmul.f32 %v857, %v881
    %v883 = vmin.f32 %v882, 1.0
    %v884 = vmax.f32 %v883, -1.0
    %v885 = vmul.f32 %v844, %v844
    %v886 = vmin.f32 16.0, %v885
    %v887 = vmul.f32 %v886, 2.1237322e-06
    %v888 = vadd.f32 %v887, 0.00028619796
    %v889 = vmul.f32 %v886, %v888
    %v890 = vadd.f32 %v889, 0.0036580483
    %v891 = vmul.f32 %v886, %v890
    %v892 = vadd.f32 %v891, 0.05243302
    %v893 = vmul.f32 %v886, %v892
    %v894 = vadd.f32 %v893, 0.18741608
    %v895 = vmul.f32 %v886, %v894
    %v896 = vadd.f32 %v895, 1.1283791
    %v897 = vmul.f32 %v844, %v896
    %v898 = vmul.f32 %v886, 3.8918573e-05
    %v899 = vadd.f32 %v898, 0.001143296
    %v900 = vmul.f32 %v886, %v899
    %v901 = vadd.f32 %v900, 0.014752088
    %v902 = vmul.f32 %v886, %v901
    %v903 = vadd.f32 %v902, 0.112945676
    %v904 = vmul.f32 %v886, %v903
    %v905 = vadd.f32 %v904, 0.4994258
    %v906 = vmul.f32 %v886, %v905
    %v907 = vadd.f32 %v906, 1.0
    %v908 = vrcp.pop %v907
    %v909 = vmul.f32 %v907, %v908
    %v910 = vsub.f32 1.0, %v909
    %v911 = vmul.f32 %v908, %v910
    %v912 = vadd.f32 %v908, %v911
    %vm913 = vweird.f32 %v907
    %vm914 = vweird.f32 %v908
    %vm915 = vmor %vm913, %vm914
    %v916 = vsel %vm915, %v908, %v912
    %v917 = vand.u32 2147483647, %v907
    %vm918 = vcmp.eq.f32.partialorder %v917, 8.507059e+37
    %v919 = vand.u32 %v907, 2147483648
    %v920 = vor.u32 1.1754944e-38, %v919
    %v921 = vsel %vm918, %v920, %v916
    %v922 = vmul.f32 %v897, %v921
    %v923 = vmin.f32 %v922, 1.0
    %v924 = vmax.f32 %v923, -1.0
    %v925 = vadd.f32 %v884, 1.0
    %v926 = vadd.f32 %v924, 1.0
    %v927 = vmul.f32 %v841, %v925
    %v928 = vmul.f32 %v842, %v926
    %v929 = vld [vmem:[%s11] sm:$0xff]
    %v930 = vld [vmem:[%s11 + $0x8] sm:$0xff]
    %v931 = vld [vmem:[%s11 + $0x10] sm:$0xff]
    %v932 = vld [vmem:[%s11 + $0x18] sm:$0xff]
    %v933 = vld [vmem:[%s11 + $0x20] sm:$0xff]
    %v934 = vld [vmem:[%s11 + $0x28] sm:$0xff]
    %v935 = vld [vmem:[%s11 + $0x30] sm:$0xff]
    %v936 = vld [vmem:[%s11 + $0x38] sm:$0xff]
    %v937 = vld [vmem:[%s11 + $0x40] sm:$0xff]
    %v938 = vld [vmem:[%s11 + $0x48] sm:$0xff]
    %v939 = vld [vmem:[%s11 + $0x50] sm:$0xff]
    %v940 = vld [vmem:[%s11 + $0x58] sm:$0xff]
    %v941 = vld [vmem:[%s11 + $0x60] sm:$0xff]
    %v942 = vld [vmem:[%s11 + $0x68] sm:$0xff]
    %v943 = vld [vmem:[%s11 + $0x70] sm:$0xff]
    %v944 = vld [vmem:[%s11 + $0x78] sm:$0xff]
    %v945 = vld [vmem:[%s12] sm:$0x1]
    %v947 = vperm.slane %v945, 0
    %949 = vmatpush.msra.mxu0 %v944
    %950 = vmatpush.msra.mxu0 %v943
    %951 = vmatpush.msra.mxu0 %v942
    %952 = vmatpush.msra.mxu0 %v941
    %953 = vmatpush.msra.mxu0 %v940
    %954 = vmatpush.msra.mxu0 %v939
    %955 = vmatpush.msra.mxu0 %v938
    %956 = vmatpush.msra.mxu0 %v937
    %957 = vmatpush.msra.mxu0 %v936
    %958 = vmatpush.msra.mxu0 %v935
    %959 = vmatpush.msra.mxu0 %v934
    %960 = vmatpush.msra.mxu0 %v933
    %961 = vmatpush.msra.mxu0 %v932
    %962 = vmatpush.msra.mxu0 %v931
    %963 = vmatpush.msra.mxu0 %v930
    %964 = vmatpush.msra.mxu0 %v929
    %965 = vmatmul.f32.gmra.mxu0 %v927
    %v966 = vpop.f32.mrf.mxu0
    %v967 = vadd.f32 %v947, %v966
    %968 = vmatmul.f32.gmra.mxu0 %v928
    %v969 = vpop.f32.mrf.mxu0
    %v970 = vadd.f32 %v947, %v969
    %971 = vdwg.mxu0
    %v972 = vadd.f32 %v802, %v967
    %v973 = vadd.f32 %v803, %v970
    %s974 = scalar_lea.vmem %s2, 1
    %v975 = vld [vmem:[%s974] sm:$0x1]
    %s976 = scalar_lea.vmem %s3, 1
    %v977 = vld [vmem:[%s976] sm:$0x1]
    %v978 = vsel %vm59, %v972, 0.0
    %979 = vadd.xlane.f32.xlu0 %v978
    %v980 = vpop.xlane.xlu0 %979
    %v981 = vsel %vm59, %v973, 0.0
    %982 = vadd.xlane.f32.xlu0 %v981
    %v983 = vpop.xlane.xlu0 %982
    %v984 = vmul.f32 %v980, %v72
    %v985 = vmul.f32 %v983, %v72
    %v986 = vsub.f32 %v972, %v984
    %v987 = vsub.f32 %v973, %v985
    %v988 = vmul.f32 %v986, %v986
    %v989 = vmul.f32 %v987, %v987
    %v990 = vsel %vm59, %v988, 0.0
    %991 = vadd.xlane.f32.xlu0 %v990
    %v992 = vpop.xlane.xlu0 %991
    %v993 = vsel %vm59, %v989, 0.0
    %994 = vadd.xlane.f32.xlu0 %v993
    %v995 = vpop.xlane.xlu0 %994
    %v996 = vmul.f32 %v992, %v72
    %v997 = vmul.f32 %v995, %v72
    %v998 = vadd.f32 %v996, 1e-05
    %v999 = vadd.f32 %v997, 1e-05
    %v1000 = vrsqrt.pop %v998
    %v1001 = vmul.f32 %v1000, %v998
    %v1002 = vmul.f32 %v1001, %v1000
    %v1003 = vmul.f32 0.5, %v1002
    %v1004 = vsub.f32 1.5, %v1003
    %v1005 = vmul.f32 %v1000, %v1004
    %vm1006 = vweird.f32 %v998
    %vm1007 = vweird.f32 %v1000
    %vm1008 = vmor %vm1006, %vm1007
    %v1009 = vsel %vm1008, %v1000, %v1005
    %v1010 = vrsqrt.pop %v999
    %v1011 = vmul.f32 %v1010, %v999
    %v1012 = vmul.f32 %v1011, %v1010
    %v1013 = vmul.f32 0.5, %v1012
    %v1014 = vsub.f32 1.5, %v1013
    %v1015 = vmul.f32 %v1010, %v1014
    %vm1016 = vweird.f32 %v999
    %vm1017 = vweird.f32 %v1010
    %vm1018 = vmor %vm1016, %vm1017
    %v1019 = vsel %vm1018, %v1010, %v1015
    %v1020 = vmul.f32 %v986, %v1009
    %v1021 = vmul.f32 %v987, %v1019
    %v1023 = vperm.slane %v975, 0
    %v1025 = vmul.f32 %v1020, %v1023
    %v1026 = vmul.f32 %v1021, %v1023
    %v1028 = vperm.slane %v977, 0
    %v1030 = vadd.f32 %v1025, %v1028
    %v1031 = vadd.f32 %v1026, %v1028
    %s1032 = scalar_lea.vmem %s4, 32
    %v1033 = vld [vmem:[%s1032] sm:$0xff]
    %v1034 = vld [vmem:[%s1032 + $0x8] sm:$0xff]
    %v1035 = vld [vmem:[%s1032 + $0x10] sm:$0xff]
    %v1036 = vld [vmem:[%s1032 + $0x18] sm:$0xff]
    %v1038 = vsel %vm59, %v1030, 0
    %v1041 = vsel %vm59, %v1031, 0
    %1043 = vmatpush.msra.mxu0 0.0
    %1044 = vmatpush.msra.mxu0 0.0
    %1045 = vmatpush.msra.mxu0 0.0
    %1046 = vmatpush.msra.mxu0 0.0
    %1047 = vmatpush.msra.mxu0 0.0
    %1048 = vmatpush.msra.mxu0 0.0
    %1049 = vmatpush.msra.mxu0 0.0
    %1050 = vmatpush.msra.mxu0 0.0
    %1051 = vmatpush.msra.mxu0 0.0
    %1052 = vmatpush.msra.mxu0 0.0
    %1053 = vmatpush.msra.mxu0 0.0
    %1054 = vmatpush.msra.mxu0 0.0
    %1055 = vmatpush.msra.mxu0 %v1036
    %1056 = vmatpush.msra.mxu0 %v1035
    %1057 = vmatpush.msra.mxu0 %v1034
    %1058 = vmatpush.msra.mxu0 %v1033
    %1059 = vmatmul.f32.gmra.mxu0 %v1038
    %v1060 = vpop.f32.mrf.mxu0
    %v1061 = vadd.f32 0.0, %v1060
    %1062 = vmatmul.f32.gmra.mxu0 %v1041
    %v1063 = vpop.f32.mrf.mxu0
    %v1064 = vadd.f32 0.0, %v1063
    %1065 = vdwg.mxu0
    %v1066 = vmul.f32 %v1061, 0.35355338
    %v1067 = vmul.f32 %v1064, 0.35355338
    %1069 = vrot.lane.b32.xlu0 %v1061, 96
    %v1070 = vpop.permute.xlu0 %1069
    %v1072 = vsel %vm159, %v1066, 0
    %v1074 = vsel %vm159, %v1070, 0
    %1076 = vmatpush.xpose.msra.mxu0 0.0
    %1077 = vmatpush.xpose.msra.mxu0 0.0
    %1078 = vmatpush.xpose.msra.mxu0 0.0
    %1079 = vmatpush.xpose.msra.mxu0 0.0
    %1080 = vmatpush.xpose.msra.mxu0 0.0
    %1081 = vmatpush.xpose.msra.mxu0 0.0
    %1082 = vmatpush.xpose.msra.mxu0 0.0
    %1083 = vmatpush.xpose.msra.mxu0 0.0
    %1084 = vmatpush.xpose.msra.mxu0 0.0
    %1085 = vmatpush.xpose.msra.mxu0 0.0
    %1086 = vmatpush.xpose.msra.mxu0 0.0
    %1087 = vmatpush.xpose.msra.mxu0 0.0
    %1088 = vmatpush.xpose.msra.mxu0 0.0
    %1089 = vmatpush.xpose.msra.mxu0 0.0
    %1090 = vmatpush.xpose.msra.mxu0 0.0
    %1091 = vmatpush.xpose.msra.mxu0 %v1074
    %1092 = vmatmul.f32.gmra.mxu0 %v1072
    %v1093 = vpop.f32.mrf.mxu0
    %v1094 = vadd.f32 0.0, %v1093
    %1095 = vdwg.mxu0
    %1097 = vrot.lane.b32.xlu0 %v1064, 96
    %v1098 = vpop.permute.xlu0 %1097
    %v1100 = vsel %vm159, %v1067, 0
    %v1102 = vsel %vm159, %v1098, 0
    %1104 = vmatpush.xpose.msra.mxu0 0.0
    %1105 = vmatpush.xpose.msra.mxu0 0.0
    %1106 = vmatpush.xpose.msra.mxu0 0.0
    %1107 = vmatpush.xpose.msra.mxu0 0.0
    %1108 = vmatpush.xpose.msra.mxu0 0.0
    %1109 = vmatpush.xpose.msra.mxu0 0.0
    %1110 = vmatpush.xpose.msra.mxu0 0.0
    %1111 = vmatpush.xpose.msra.mxu0 0.0
    %1112 = vmatpush.xpose.msra.mxu0 0.0
    %1113 = vmatpush.xpose.msra.mxu0 0.0
    %1114 = vmatpush.xpose.msra.mxu0 0.0
    %1115 = vmatpush.xpose.msra.mxu0 0.0
    %1116 = vmatpush.xpose.msra.mxu0 0.0
    %1117 = vmatpush.xpose.msra.mxu0 0.0
    %1118 = vmatpush.xpose.msra.mxu0 0.0
    %1119 = vmatpush.xpose.msra.mxu0 %v1102
    %1120 = vmatmul.f32.gmra.mxu0 %v1100
    %v1121 = vpop.f32.mrf.mxu0
    %v1122 = vadd.f32 0.0, %v1121
    %1123 = vdwg.mxu0
    %v1124 = vsel %vm159, %v1094, -inf
    %1125 = vmax.xlane.f32.xlu0 %v1124
    %v1126 = vpop.xlane.xlu0 %1125
    %v1127 = vsel %vm159, %v1122, -inf
    %1128 = vmax.xlane.f32.xlu0 %v1127
    %v1129 = vpop.xlane.xlu0 %1128
    %v1130 = vsub.f32 %v1094, %v1126
    %v1131 = vsub.f32 %v1122, %v1129
    %v1132 = vmul.f32 %v1130, 1.442695
    %v1133 = vpow.pop %v1132
    %v1134 = vmul.f32 %v1131, 1.442695
    %v1135 = vpow.pop %v1134
    %v1136 = vsel %vm159, %v1133, 0.0
    %1137 = vadd.xlane.f32.xlu0 %v1136
    %v1138 = vpop.xlane.xlu0 %1137
    %v1139 = vsel %vm159, %v1135, 0.0
    %1140 = vadd.xlane.f32.xlu0 %v1139
    %v1141 = vpop.xlane.xlu0 %1140
    %v1142 = vrcp.pop %v1138
    %v1143 = vrcp.pop %v1141
    %v1144 = vmul.f32 %v1133, %v1142
    %v1145 = vmul.f32 %v1135, %v1143
    %1146 = vrot.lane.b32.xlu0 %v1061, 64
    %v1147 = vpop.permute.xlu0 %1146
    %v1150 = vsel %vm159, %v1144, 0
    %1152 = vmatpush.msra.mxu0 0.0
    %1153 = vmatpush.msra.mxu0 0.0
    %1154 = vmatpush.msra.mxu0 0.0
    %1155 = vmatpush.msra.mxu0 0.0
    %1156 = vmatpush.msra.mxu0 0.0
    %1157 = vmatpush.msra.mxu0 0.0
    %1158 = vmatpush.msra.mxu0 0.0
    %1159 = vmatpush.msra.mxu0 0.0
    %1160 = vmatpush.msra.mxu0 0.0
    %1161 = vmatpush.msra.mxu0 0.0
    %1162 = vmatpush.msra.mxu0 0.0
    %1163 = vmatpush.msra.mxu0 0.0
    %1164 = vmatpush.msra.mxu0 0.0
    %1165 = vmatpush.msra.mxu0 0.0
    %1166 = vmatpush.msra.mxu0 0.0
    %1167 = vmatpush.msra.mxu0 %v1147
    %1168 = vmatmul.f32.gmra.mxu0 %v1150
    %v1169 = vpop.f32.mrf.mxu0
    %v1170 = vadd.f32 0.0, %v1169
    %1171 = vdwg.mxu0
    %1172 = vrot.lane.b32.xlu0 %v1064, 64
    %v1173 = vpop.permute.xlu0 %1172
    %v1176 = vsel %vm159, %v1145, 0
    %1178 = vmatpush.msra.mxu0 0.0
    %1179 = vmatpush.msra.mxu0 0.0
    %1180 = vmatpush.msra.mxu0 0.0
    %1181 = vmatpush.msra.mxu0 0.0
    %1182 = vmatpush.msra.mxu0 0.0
    %1183 = vmatpush.msra.mxu0 0.0
    %1184 = vmatpush.msra.mxu0 0.0
    %1185 = vmatpush.msra.mxu0 0.0
    %1186 = vmatpush.msra.mxu0 0.0
    %1187 = vmatpush.msra.mxu0 0.0
    %1188 = vmatpush.msra.mxu0 0.0
    %1189 = vmatpush.msra.mxu0 0.0
    %1190 = vmatpush.msra.mxu0 0.0
    %1191 = vmatpush.msra.mxu0 0.0
    %1192 = vmatpush.msra.mxu0 0.0
    %1193 = vmatpush.msra.mxu0 %v1173
    %1194 = vmatmul.f32.gmra.mxu0 %v1176
    %v1195 = vpop.f32.mrf.mxu0
    %v1196 = vadd.f32 0.0, %v1195
    %1197 = vdwg.mxu0
    %1198 = vrot.lane.b32.xlu0 %v1066, 120
    %v1199 = vpop.permute.xlu0 %1198
    %1200 = vrot.lane.b32.xlu0 %v1061, 88
    %v1201 = vpop.permute.xlu0 %1200
    %v1202 = vsel %vm159, %v1199, 0
    %v1204 = vsel %vm159, %v1201, 0
    %1206 = vmatpush.xpose.msra.mxu0 0.0
    %1207 = vmatpush.xpose.msra.mxu0 0.0
    %1208 = vmatpush.xpose.msra.mxu0 0.0
    %1209 = vmatpush.xpose.msra.mxu0 0.0
    %1210 = vmatpush.xpose.msra.mxu0 0.0
    %1211 = vmatpush.xpose.msra.mxu0 0.0
    %1212 = vmatpush.xpose.msra.mxu0 0.0
    %1213 = vmatpush.xpose.msra.mxu0 0.0
    %1214 = vmatpush.xpose.msra.mxu0 0.0
    %1215 = vmatpush.xpose.msra.mxu0 0.0
    %1216 = vmatpush.xpose.msra.mxu0 0.0
    %1217 = vmatpush.xpose.msra.mxu0 0.0
    %1218 = vmatpush.xpose.msra.mxu0 0.0
    %1219 = vmatpush.xpose.msra.mxu0 0.0
    %1220 = vmatpush.xpose.msra.mxu0 0.0
    %1221 = vmatpush.xpose.msra.mxu0 %v1204
    %1222 = vmatmul.f32.gmra.mxu0 %v1202
    %v1223 = vpop.f32.mrf.mxu0
    %v1224 = vadd.f32 0.0, %v1223
    %1225 = vdwg.mxu0
    %1226 = vrot.lane.b32.xlu0 %v1067, 120
    %v1227 = vpop.permute.xlu0 %1226
    %1228 = vrot.lane.b32.xlu0 %v1064, 88
    %v1229 = vpop.permute.xlu0 %1228
    %v1230 = vsel %vm159, %v1227, 0
    %v1232 = vsel %vm159, %v1229, 0
    %1234 = vmatpush.xpose.msra.mxu0 0.0
    %1235 = vmatpush.xpose.msra.mxu0 0.0
    %1236 = vmatpush.xpose.msra.mxu0 0.0
    %1237 = vmatpush.xpose.msra.mxu0 0.0
    %1238 = vmatpush.xpose.msra.mxu0 0.0
    %1239 = vmatpush.xpose.msra.mxu0 0.0
    %1240 = vmatpush.xpose.msra.mxu0 0.0
    %1241 = vmatpush.xpose.msra.mxu0 0.0
    %1242 = vmatpush.xpose.msra.mxu0 0.0
    %1243 = vmatpush.xpose.msra.mxu0 0.0
    %1244 = vmatpush.xpose.msra.mxu0 0.0
    %1245 = vmatpush.xpose.msra.mxu0 0.0
    %1246 = vmatpush.xpose.msra.mxu0 0.0
    %1247 = vmatpush.xpose.msra.mxu0 0.0
    %1248 = vmatpush.xpose.msra.mxu0 0.0
    %1249 = vmatpush.xpose.msra.mxu0 %v1232
    %1250 = vmatmul.f32.gmra.mxu0 %v1230
    %v1251 = vpop.f32.mrf.mxu0
    %v1252 = vadd.f32 0.0, %v1251
    %1253 = vdwg.mxu0
    %v1254 = vsel %vm159, %v1224, -inf
    %1255 = vmax.xlane.f32.xlu0 %v1254
    %v1256 = vpop.xlane.xlu0 %1255
    %v1257 = vsel %vm159, %v1252, -inf
    %1258 = vmax.xlane.f32.xlu0 %v1257
    %v1259 = vpop.xlane.xlu0 %1258
    %v1260 = vsub.f32 %v1224, %v1256
    %v1261 = vsub.f32 %v1252, %v1259
    %v1262 = vmul.f32 %v1260, 1.442695
    %v1263 = vpow.pop %v1262
    %v1264 = vmul.f32 %v1261, 1.442695
    %v1265 = vpow.pop %v1264
    %v1266 = vsel %vm159, %v1263, 0.0
    %1267 = vadd.xlane.f32.xlu0 %v1266
    %v1268 = vpop.xlane.xlu0 %1267
    %v1269 = vsel %vm159, %v1265, 0.0
    %1270 = vadd.xlane.f32.xlu0 %v1269
    %v1271 = vpop.xlane.xlu0 %1270
    %v1272 = vrcp.pop %v1268
    %v1273 = vrcp.pop %v1271
    %v1274 = vmul.f32 %v1263, %v1272
    %v1275 = vmul.f32 %v1265, %v1273
    %1276 = vrot.lane.b32.xlu0 %v1061, 56
    %v1277 = vpop.permute.xlu0 %1276
    %v1280 = vsel %vm159, %v1274, 0
    %1282 = vmatpush.msra.mxu0 0.0
    %1283 = vmatpush.msra.mxu0 0.0
    %1284 = vmatpush.msra.mxu0 0.0
    %1285 = vmatpush.msra.mxu0 0.0
    %1286 = vmatpush.msra.mxu0 0.0
    %1287 = vmatpush.msra.mxu0 0.0
    %1288 = vmatpush.msra.mxu0 0.0
    %1289 = vmatpush.msra.mxu0 0.0
    %1290 = vmatpush.msra.mxu0 0.0
    %1291 = vmatpush.msra.mxu0 0.0
    %1292 = vmatpush.msra.mxu0 0.0
    %1293 = vmatpush.msra.mxu0 0.0
    %1294 = vmatpush.msra.mxu0 0.0
    %1295 = vmatpush.msra.mxu0 0.0
    %1296 = vmatpush.msra.mxu0 0.0
    %1297 = vmatpush.msra.mxu0 %v1277
    %1298 = vmatmul.f32.gmra.mxu0 %v1280
    %v1299 = vpop.f32.mrf.mxu0
    %v1300 = vadd.f32 0.0, %v1299
    %1301 = vdwg.mxu0
    %1302 = vrot.lane.b32.xlu0 %v1064, 56
    %v1303 = vpop.permute.xlu0 %1302
    %v1306 = vsel %vm159, %v1275, 0
    %1308 = vmatpush.msra.mxu0 0.0
    %1309 = vmatpush.msra.mxu0 0.0
    %1310 = vmatpush.msra.mxu0 0.0
    %1311 = vmatpush.msra.mxu0 0.0
    %1312 = vmatpush.msra.mxu0 0.0
    %1313 = vmatpush.msra.mxu0 0.0
    %1314 = vmatpush.msra.mxu0 0.0
    %1315 = vmatpush.msra.mxu0 0.0
    %1316 = vmatpush.msra.mxu0 0.0
    %1317 = vmatpush.msra.mxu0 0.0
    %1318 = vmatpush.msra.mxu0 0.0
    %1319 = vmatpush.msra.mxu0 0.0
    %1320 = vmatpush.msra.mxu0 0.0
    %1321 = vmatpush.msra.mxu0 0.0
    %1322 = vmatpush.msra.mxu0 0.0
    %1323 = vmatpush.msra.mxu0 %v1303
    %1324 = vmatmul.f32.gmra.mxu0 %v1306
    %v1325 = vpop.f32.mrf.mxu0
    %v1326 = vadd.f32 0.0, %v1325
    %1327 = vdwg.mxu0
    %1328 = vrot.lane.b32.xlu0 %v1066, 112
    %v1329 = vpop.permute.xlu0 %1328
    %1330 = vrot.lane.b32.xlu0 %v1061, 80
    %v1331 = vpop.permute.xlu0 %1330
    %v1332 = vsel %vm159, %v1329, 0
    %v1334 = vsel %vm159, %v1331, 0
    %1336 = vmatpush.xpose.msra.mxu0 0.0
    %1337 = vmatpush.xpose.msra.mxu0 0.0
    %1338 = vmatpush.xpose.msra.mxu0 0.0
    %1339 = vmatpush.xpose.msra.mxu0 0.0
    %1340 = vmatpush.xpose.msra.mxu0 0.0
    %1341 = vmatpush.xpose.msra.mxu0 0.0
    %1342 = vmatpush.xpose.msra.mxu0 0.0
    %1343 = vmatpush.xpose.msra.mxu0 0.0
    %1344 = vmatpush.xpose.msra.mxu0 0.0
    %1345 = vmatpush.xpose.msra.mxu0 0.0
    %1346 = vmatpush.xpose.msra.mxu0 0.0
    %1347 = vmatpush.xpose.msra.mxu0 0.0
    %1348 = vmatpush.xpose.msra.mxu0 0.0
    %1349 = vmatpush.xpose.msra.mxu0 0.0
    %1350 = vmatpush.xpose.msra.mxu0 0.0
    %1351 = vmatpush.xpose.msra.mxu0 %v1334
    %1352 = vmatmul.f32.gmra.mxu0 %v1332
    %v1353 = vpop.f32.mrf.mxu0
    %v1354 = vadd.f32 0.0, %v1353
    %1355 = vdwg.mxu0
    %1356 = vrot.lane.b32.xlu0 %v1067, 112
    %v1357 = vpop.permute.xlu0 %1356
    %1358 = vrot.lane.b32.xlu0 %v1064, 80
    %v1359 = vpop.permute.xlu0 %1358
    %v1360 = vsel %vm159, %v1357, 0
    %v1362 = vsel %vm159, %v1359, 0
    %1364 = vmatpush.xpose.msra.mxu0 0.0
    %1365 = vmatpush.xpose.msra.mxu0 0.0
    %1366 = vmatpush.xpose.msra.mxu0 0.0
    %1367 = vmatpush.xpose.msra.mxu0 0.0
    %1368 = vmatpush.xpose.msra.mxu0 0.0
    %1369 = vmatpush.xpose.msra.mxu0 0.0
    %1370 = vmatpush.xpose.msra.mxu0 0.0
    %1371 = vmatpush.xpose.msra.mxu0 0.0
    %1372 = vmatpush.xpose.msra.mxu0 0.0
    %1373 = vmatpush.xpose.msra.mxu0 0.0
    %1374 = vmatpush.xpose.msra.mxu0 0.0
    %1375 = vmatpush.xpose.msra.mxu0 0.0
    %1376 = vmatpush.xpose.msra.mxu0 0.0
    %1377 = vmatpush.xpose.msra.mxu0 0.0
    %1378 = vmatpush.xpose.msra.mxu0 0.0
    %1379 = vmatpush.xpose.msra.mxu0 %v1362
    %1380 = vmatmul.f32.gmra.mxu0 %v1360
    %v1381 = vpop.f32.mrf.mxu0
    %v1382 = vadd.f32 0.0, %v1381
    %1383 = vdwg.mxu0
    %v1384 = vsel %vm159, %v1354, -inf
    %1385 = vmax.xlane.f32.xlu0 %v1384
    %v1386 = vpop.xlane.xlu0 %1385
    %v1387 = vsel %vm159, %v1382, -inf
    %1388 = vmax.xlane.f32.xlu0 %v1387
    %v1389 = vpop.xlane.xlu0 %1388
    %v1390 = vsub.f32 %v1354, %v1386
    %v1391 = vsub.f32 %v1382, %v1389
    %v1392 = vmul.f32 %v1390, 1.442695
    %v1393 = vpow.pop %v1392
    %v1394 = vmul.f32 %v1391, 1.442695
    %v1395 = vpow.pop %v1394
    %v1396 = vsel %vm159, %v1393, 0.0
    %1397 = vadd.xlane.f32.xlu0 %v1396
    %v1398 = vpop.xlane.xlu0 %1397
    %v1399 = vsel %vm159, %v1395, 0.0
    %1400 = vadd.xlane.f32.xlu0 %v1399
    %v1401 = vpop.xlane.xlu0 %1400
    %v1402 = vrcp.pop %v1398
    %v1403 = vrcp.pop %v1401
    %v1404 = vmul.f32 %v1393, %v1402
    %v1405 = vmul.f32 %v1395, %v1403
    %1406 = vrot.lane.b32.xlu0 %v1061, 48
    %v1407 = vpop.permute.xlu0 %1406
    %v1410 = vsel %vm159, %v1404, 0
    %1412 = vmatpush.msra.mxu0 0.0
    %1413 = vmatpush.msra.mxu0 0.0
    %1414 = vmatpush.msra.mxu0 0.0
    %1415 = vmatpush.msra.mxu0 0.0
    %1416 = vmatpush.msra.mxu0 0.0
    %1417 = vmatpush.msra.mxu0 0.0
    %1418 = vmatpush.msra.mxu0 0.0
    %1419 = vmatpush.msra.mxu0 0.0
    %1420 = vmatpush.msra.mxu0 0.0
    %1421 = vmatpush.msra.mxu0 0.0
    %1422 = vmatpush.msra.mxu0 0.0
    %1423 = vmatpush.msra.mxu0 0.0
    %1424 = vmatpush.msra.mxu0 0.0
    %1425 = vmatpush.msra.mxu0 0.0
    %1426 = vmatpush.msra.mxu0 0.0
    %1427 = vmatpush.msra.mxu0 %v1407
    %1428 = vmatmul.f32.gmra.mxu0 %v1410
    %v1429 = vpop.f32.mrf.mxu0
    %v1430 = vadd.f32 0.0, %v1429
    %1431 = vdwg.mxu0
    %1432 = vrot.lane.b32.xlu0 %v1064, 48
    %v1433 = vpop.permute.xlu0 %1432
    %v1436 = vsel %vm159, %v1405, 0
    %1438 = vmatpush.msra.mxu0 0.0
    %1439 = vmatpush.msra.mxu0 0.0
    %1440 = vmatpush.msra.mxu0 0.0
    %1441 = vmatpush.msra.mxu0 0.0
    %1442 = vmatpush.msra.mxu0 0.0
    %1443 = vmatpush.msra.mxu0 0.0
    %1444 = vmatpush.msra.mxu0 0.0
    %1445 = vmatpush.msra.mxu0 0.0
    %1446 = vmatpush.msra.mxu0 0.0
    %1447 = vmatpush.msra.mxu0 0.0
    %1448 = vmatpush.msra.mxu0 0.0
    %1449 = vmatpush.msra.mxu0 0.0
    %1450 = vmatpush.msra.mxu0 0.0
    %1451 = vmatpush.msra.mxu0 0.0
    %1452 = vmatpush.msra.mxu0 0.0
    %1453 = vmatpush.msra.mxu0 %v1433
    %1454 = vmatmul.f32.gmra.mxu0 %v1436
    %v1455 = vpop.f32.mrf.mxu0
    %v1456 = vadd.f32 0.0, %v1455
    %1457 = vdwg.mxu0
    %1458 = vrot.lane.b32.xlu0 %v1066, 104
    %v1459 = vpop.permute.xlu0 %1458
    %1460 = vrot.lane.b32.xlu0 %v1061, 72
    %v1461 = vpop.permute.xlu0 %1460
    %v1462 = vsel %vm159, %v1459, 0
    %v1464 = vsel %vm159, %v1461, 0
    %1466 = vmatpush.xpose.msra.mxu0 0.0
    %1467 = vmatpush.xpose.msra.mxu0 0.0
    %1468 = vmatpush.xpose.msra.mxu0 0.0
    %1469 = vmatpush.xpose.msra.mxu0 0.0
    %1470 = vmatpush.xpose.msra.mxu0 0.0
    %1471 = vmatpush.xpose.msra.mxu0 0.0
    %1472 = vmatpush.xpose.msra.mxu0 0.0
    %1473 = vmatpush.xpose.msra.mxu0 0.0
    %1474 = vmatpush.xpose.msra.mxu0 0.0
    %1475 = vmatpush.xpose.msra.mxu0 0.0
    %1476 = vmatpush.xpose.msra.mxu0 0.0
    %1477 = vmatpush.xpose.msra.mxu0 0.0
    %1478 = vmatpush.xpose.msra.mxu0 0.0
    %1479 = vmatpush.xpose.msra.mxu0 0.0
    %1480 = vmatpush.xpose.msra.mxu0 0.0
    %1481 = vmatpush.xpose.msra.mxu0 %v1464
    %1482 = vmatmul.f32.gmra.mxu0 %v1462
    %v1483 = vpop.f32.mrf.mxu0
    %v1484 = vadd.f32 0.0, %v1483
    %1485 = vdwg.mxu0
    %1486 = vrot.lane.b32.xlu0 %v1067, 104
    %v1487 = vpop.permute.xlu0 %1486
    %1488 = vrot.lane.b32.xlu0 %v1064, 72
    %v1489 = vpop.permute.xlu0 %1488
    %v1490 = vsel %vm159, %v1487, 0
    %v1492 = vsel %vm159, %v1489, 0
    %1494 = vmatpush.xpose.msra.mxu0 0.0
    %1495 = vmatpush.xpose.msra.mxu0 0.0
    %1496 = vmatpush.xpose.msra.mxu0 0.0
    %1497 = vmatpush.xpose.msra.mxu0 0.0
    %1498 = vmatpush.xpose.msra.mxu0 0.0
    %1499 = vmatpush.xpose.msra.mxu0 0.0
    %1500 = vmatpush.xpose.msra.mxu0 0.0
    %1501 = vmatpush.xpose.msra.mxu0 0.0
    %1502 = vmatpush.xpose.msra.mxu0 0.0
    %1503 = vmatpush.xpose.msra.mxu0 0.0
    %1504 = vmatpush.xpose.msra.mxu0 0.0
    %1505 = vmatpush.xpose.msra.mxu0 0.0
    %1506 = vmatpush.xpose.msra.mxu0 0.0
    %1507 = vmatpush.xpose.msra.mxu0 0.0
    %1508 = vmatpush.xpose.msra.mxu0 0.0
    %1509 = vmatpush.xpose.msra.mxu0 %v1492
    %1510 = vmatmul.f32.gmra.mxu0 %v1490
    %v1511 = vpop.f32.mrf.mxu0
    %v1512 = vadd.f32 0.0, %v1511
    %1513 = vdwg.mxu0
    %v1514 = vsel %vm159, %v1484, -inf
    %1515 = vmax.xlane.f32.xlu0 %v1514
    %v1516 = vpop.xlane.xlu0 %1515
    %v1517 = vsel %vm159, %v1512, -inf
    %1518 = vmax.xlane.f32.xlu0 %v1517
    %v1519 = vpop.xlane.xlu0 %1518
    %v1520 = vsub.f32 %v1484, %v1516
    %v1521 = vsub.f32 %v1512, %v1519
    %v1522 = vmul.f32 %v1520, 1.442695
    %v1523 = vpow.pop %v1522
    %v1524 = vmul.f32 %v1521, 1.442695
    %v1525 = vpow.pop %v1524
    %v1526 = vsel %vm159, %v1523, 0.0
    %1527 = vadd.xlane.f32.xlu0 %v1526
    %v1528 = vpop.xlane.xlu0 %1527
    %v1529 = vsel %vm159, %v1525, 0.0
    %1530 = vadd.xlane.f32.xlu0 %v1529
    %v1531 = vpop.xlane.xlu0 %1530
    %v1532 = vrcp.pop %v1528
    %v1533 = vrcp.pop %v1531
    %v1534 = vmul.f32 %v1523, %v1532
    %v1535 = vmul.f32 %v1525, %v1533
    %1536 = vrot.lane.b32.xlu0 %v1061, 40
    %v1537 = vpop.permute.xlu0 %1536
    %v1540 = vsel %vm159, %v1534, 0
    %1542 = vmatpush.msra.mxu0 0.0
    %1543 = vmatpush.msra.mxu0 0.0
    %1544 = vmatpush.msra.mxu0 0.0
    %1545 = vmatpush.msra.mxu0 0.0
    %1546 = vmatpush.msra.mxu0 0.0
    %1547 = vmatpush.msra.mxu0 0.0
    %1548 = vmatpush.msra.mxu0 0.0
    %1549 = vmatpush.msra.mxu0 0.0
    %1550 = vmatpush.msra.mxu0 0.0
    %1551 = vmatpush.msra.mxu0 0.0
    %1552 = vmatpush.msra.mxu0 0.0
    %1553 = vmatpush.msra.mxu0 0.0
    %1554 = vmatpush.msra.mxu0 0.0
    %1555 = vmatpush.msra.mxu0 0.0
    %1556 = vmatpush.msra.mxu0 0.0
    %1557 = vmatpush.msra.mxu0 %v1537
    %1558 = vmatmul.f32.gmra.mxu0 %v1540
    %v1559 = vpop.f32.mrf.mxu0
    %v1560 = vadd.f32 0.0, %v1559
    %1561 = vdwg.mxu0
    %1562 = vrot.lane.b32.xlu0 %v1064, 40
    %v1563 = vpop.permute.xlu0 %1562
    %v1566 = vsel %vm159, %v1535, 0
    %1568 = vmatpush.msra.mxu0 0.0
    %1569 = vmatpush.msra.mxu0 0.0
    %1570 = vmatpush.msra.mxu0 0.0
    %1571 = vmatpush.msra.mxu0 0.0
    %1572 = vmatpush.msra.mxu0 0.0
    %1573 = vmatpush.msra.mxu0 0.0
    %1574 = vmatpush.msra.mxu0 0.0
    %1575 = vmatpush.msra.mxu0 0.0
    %1576 = vmatpush.msra.mxu0 0.0
    %1577 = vmatpush.msra.mxu0 0.0
    %1578 = vmatpush.msra.mxu0 0.0
    %1579 = vmatpush.msra.mxu0 0.0
    %1580 = vmatpush.msra.mxu0 0.0
    %1581 = vmatpush.msra.mxu0 0.0
    %1582 = vmatpush.msra.mxu0 0.0
    %1583 = vmatpush.msra.mxu0 %v1563
    %1584 = vmatmul.f32.gmra.mxu0 %v1566
    %v1585 = vpop.f32.mrf.mxu0
    %v1586 = vadd.f32 0.0, %v1585
    %1587 = vdwg.mxu0
    %1590 = vrot.lane.b32.xlu0 %v1300, 8
    %v1591 = vpop.permute.xlu0 %1590
    %1592 = vrot.lane.b32.xlu0 %v1326, 8
    %v1593 = vpop.permute.xlu0 %1592
    %1598 = vrot.lane.b32.xlu0 %v1430, 16
    %v1599 = vpop.permute.xlu0 %1598
    %1600 = vrot.lane.b32.xlu0 %v1456, 16
    %v1601 = vpop.permute.xlu0 %1600
    %1606 = vrot.lane.b32.xlu0 %v1560, 24
    %v1607 = vpop.permute.xlu0 %1606
    %1608 = vrot.lane.b32.xlu0 %v1586, 24
    %v1609 = vpop.permute.xlu0 %1608
    %v1612 = vsel %vm159, %v1170, %v1591
    %v1613 = vsel %vm159, %v1196, %v1593
    %v1614 = vsel %vm703, %v1612, %v1599
    %v1615 = vsel %vm703, %v1613, %v1601
    %v1616 = vsel %vm706, %v1614, %v1607
    %v1617 = vsel %vm706, %v1615, %v1609
    %s1618 = scalar_lea.vmem %s5, 32
    %v1619 = vld [vmem:[%s1618] sm:$0xff]
    %v1620 = vld [vmem:[%s1618 + $0x8] sm:$0xff]
    %v1621 = vld [vmem:[%s1618 + $0x10] sm:$0xff]
    %v1622 = vld [vmem:[%s1618 + $0x18] sm:$0xff]
    %s1623 = scalar_lea.vmem %s6, 1
    %v1624 = vld [vmem:[%s1623] sm:$0x1]
    %v1626 = vperm.slane %v1624, 0
    %v1629 = vsel %vm59, %v1616, 0
    %v1632 = vsel %vm59, %v1617, 0
    %1634 = vmatpush.msra.mxu0 0.0
    %1635 = vmatpush.msra.mxu0 0.0
    %1636 = vmatpush.msra.mxu0 0.0
    %1637 = vmatpush.msra.mxu0 0.0
    %1638 = vmatpush.msra.mxu0 0.0
    %1639 = vmatpush.msra.mxu0 0.0
    %1640 = vmatpush.msra.mxu0 0.0
    %1641 = vmatpush.msra.mxu0 0.0
    %1642 = vmatpush.msra.mxu0 0.0
    %1643 = vmatpush.msra.mxu0 0.0
    %1644 = vmatpush.msra.mxu0 0.0
    %1645 = vmatpush.msra.mxu0 0.0
    %1646 = vmatpush.msra.mxu0 %v1622
    %1647 = vmatpush.msra.mxu0 %v1621
    %1648 = vmatpush.msra.mxu0 %v1620
    %1649 = vmatpush.msra.mxu0 %v1619
    %1650 = vmatmul.f32.gmra.mxu0 %v1629
    %v1651 = vpop.f32.mrf.mxu0
    %v1652 = vadd.f32 %v1626, %v1651
    %1653 = vmatmul.f32.gmra.mxu0 %v1632
    %v1654 = vpop.f32.mrf.mxu0
    %v1655 = vadd.f32 %v1626, %v1654
    %1656 = vdwg.mxu0
    %v1657 = vadd.f32 %v972, %v1652
    %v1658 = vadd.f32 %v973, %v1655
    %s1659 = scalar_lea.vmem %s7, 1
    %v1660 = vld [vmem:[%s1659] sm:$0x1]
    %s1661 = scalar_lea.vmem %s8, 1
    %v1662 = vld [vmem:[%s1661] sm:$0x1]
    %v1663 = vsel %vm59, %v1657, 0.0
    %1664 = vadd.xlane.f32.xlu0 %v1663
    %v1665 = vpop.xlane.xlu0 %1664
    %v1666 = vsel %vm59, %v1658, 0.0
    %1667 = vadd.xlane.f32.xlu0 %v1666
    %v1668 = vpop.xlane.xlu0 %1667
    %v1669 = vmul.f32 %v1665, %v72
    %v1670 = vmul.f32 %v1668, %v72
    %v1671 = vsub.f32 %v1657, %v1669
    %v1672 = vsub.f32 %v1658, %v1670
    %v1673 = vmul.f32 %v1671, %v1671
    %v1674 = vmul.f32 %v1672, %v1672
    %v1675 = vsel %vm59, %v1673, 0.0
    %1676 = vadd.xlane.f32.xlu0 %v1675
    %v1677 = vpop.xlane.xlu0 %1676
    %v1678 = vsel %vm59, %v1674, 0.0
    %1679 = vadd.xlane.f32.xlu0 %v1678
    %v1680 = vpop.xlane.xlu0 %1679
    %v1681 = vmul.f32 %v1677, %v72
    %v1682 = vmul.f32 %v1680, %v72
    %v1683 = vadd.f32 %v1681, 1e-05
    %v1684 = vadd.f32 %v1682, 1e-05
    %v1685 = vrsqrt.pop %v1683
    %v1686 = vmul.f32 %v1685, %v1683
    %v1687 = vmul.f32 %v1686, %v1685
    %v1688 = vmul.f32 0.5, %v1687
    %v1689 = vsub.f32 1.5, %v1688
    %v1690 = vmul.f32 %v1685, %v1689
    %vm1691 = vweird.f32 %v1683
    %vm1692 = vweird.f32 %v1685
    %vm1693 = vmor %vm1691, %vm1692
    %v1694 = vsel %vm1693, %v1685, %v1690
    %v1695 = vrsqrt.pop %v1684
    %v1696 = vmul.f32 %v1695, %v1684
    %v1697 = vmul.f32 %v1696, %v1695
    %v1698 = vmul.f32 0.5, %v1697
    %v1699 = vsub.f32 1.5, %v1698
    %v1700 = vmul.f32 %v1695, %v1699
    %vm1701 = vweird.f32 %v1684
    %vm1702 = vweird.f32 %v1695
    %vm1703 = vmor %vm1701, %vm1702
    %v1704 = vsel %vm1703, %v1695, %v1700
    %v1705 = vmul.f32 %v1671, %v1694
    %v1706 = vmul.f32 %v1672, %v1704
    %v1708 = vperm.slane %v1660, 0
    %v1710 = vmul.f32 %v1705, %v1708
    %v1711 = vmul.f32 %v1706, %v1708
    %v1713 = vperm.slane %v1662, 0
    %v1715 = vadd.f32 %v1710, %v1713
    %v1716 = vadd.f32 %v1711, %v1713
    %s1717 = scalar_lea.vmem %s9, 32
    %v1718 = vld [vmem:[%s1717] sm:$0xff]
    %v1719 = vld [vmem:[%s1717 + $0x8] sm:$0xff]
    %v1720 = vld [vmem:[%s1717 + $0x10] sm:$0xff]
    %v1721 = vld [vmem:[%s1717 + $0x18] sm:$0xff]
    %s1722 = scalar_lea.vmem %s10, 1
    %v1723 = vld [vmem:[%s1722] sm:$0x1]
    %v1725 = vperm.slane %v1723, 0
    %v1728 = vsel %vm59, %v1715, 0
    %v1731 = vsel %vm59, %v1716, 0
    %1733 = vmatpush.msra.mxu0 0.0
    %1734 = vmatpush.msra.mxu0 0.0
    %1735 = vmatpush.msra.mxu0 0.0
    %1736 = vmatpush.msra.mxu0 0.0
    %1737 = vmatpush.msra.mxu0 0.0
    %1738 = vmatpush.msra.mxu0 0.0
    %1739 = vmatpush.msra.mxu0 0.0
    %1740 = vmatpush.msra.mxu0 0.0
    %1741 = vmatpush.msra.mxu0 0.0
    %1742 = vmatpush.msra.mxu0 0.0
    %1743 = vmatpush.msra.mxu0 0.0
    %1744 = vmatpush.msra.mxu0 0.0
    %1745 = vmatpush.msra.mxu0 %v1721
    %1746 = vmatpush.msra.mxu0 %v1720
    %1747 = vmatpush.msra.mxu0 %v1719
    %1748 = vmatpush.msra.mxu0 %v1718
    %1749 = vmatmul.f32.gmra.mxu0 %v1728
    %v1750 = vpop.f32.mrf.mxu0
    %v1751 = vadd.f32 %v1725, %v1750
    %1752 = vmatmul.f32.gmra.mxu0 %v1731
    %v1753 = vpop.f32.mrf.mxu0
    %v1754 = vadd.f32 %v1725, %v1753
    %1755 = vdwg.mxu0
    %v1756 = vmul.f32 %v1751, 0.5
    %v1757 = vmul.f32 %v1754, 0.5
    %v1758 = vmul.f32 %v1751, 0.70710677
    %v1759 = vmul.f32 %v1754, 0.70710677
    %v1760 = vmul.f32 %v1758, %v1758
    %v1761 = vmin.f32 16.0, %v1760
    %v1762 = vmul.f32 %v1761, 2.1237322e-06
    %v1763 = vadd.f32 %v1762, 0.00028619796
    %v1764 = vmul.f32 %v1761, %v1763
    %v1765 = vadd.f32 %v1764, 0.0036580483
    %v1766 = vmul.f32 %v1761, %v1765
    %v1767 = vadd.f32 %v1766, 0.05243302
    %v1768 = vmul.f32 %v1761, %v1767
    %v1769 = vadd.f32 %v1768, 0.18741608
    %v1770 = vmul.f32 %v1761, %v1769
    %v1771 = vadd.f32 %v1770, 1.1283791
    %v1772 = vmul.f32 %v1758, %v1771
    %v1773 = vmul.f32 %v1761, 3.8918573e-05
    %v1774 = vadd.f32 %v1773, 0.001143296
    %v1775 = vmul.f32 %v1761, %v1774
    %v1776 = vadd.f32 %v1775, 0.014752088
    %v1777 = vmul.f32 %v1761, %v1776
    %v1778 = vadd.f32 %v1777, 0.112945676
    %v1779 = vmul.f32 %v1761, %v1778
    %v1780 = vadd.f32 %v1779, 0.4994258
    %v1781 = vmul.f32 %v1761, %v1780
    %v1782 = vadd.f32 %v1781, 1.0
    %v1783 = vrcp.pop %v1782
    %v1784 = vmul.f32 %v1782, %v1783
    %v1785 = vsub.f32 1.0, %v1784
    %v1786 = vmul.f32 %v1783, %v1785
    %v1787 = vadd.f32 %v1783, %v1786
    %vm1788 = vweird.f32 %v1782
    %vm1789 = vweird.f32 %v1783
    %vm1790 = vmor %vm1788, %vm1789
    %v1791 = vsel %vm1790, %v1783, %v1787
    %v1792 = vand.u32 2147483647, %v1782
    %vm1793 = vcmp.eq.f32.partialorder %v1792, 8.507059e+37
    %v1794 = vand.u32 %v1782, 2147483648
    %v1795 = vor.u32 1.1754944e-38, %v1794
    %v1796 = vsel %vm1793, %v1795, %v1791
    %v1797 = vmul.f32 %v1772, %v1796
    %v1798 = vmin.f32 %v1797, 1.0
    %v1799 = vmax.f32 %v1798, -1.0
    %v1800 = vmul.f32 %v1759, %v1759
    %v1801 = vmin.f32 16.0, %v1800
    %v1802 = vmul.f32 %v1801, 2.1237322e-06
    %v1803 = vadd.f32 %v1802, 0.00028619796
    %v1804 = vmul.f32 %v1801, %v1803
    %v1805 = vadd.f32 %v1804, 0.0036580483
    %v1806 = vmul.f32 %v1801, %v1805
    %v1807 = vadd.f32 %v1806, 0.05243302
    %v1808 = vmul.f32 %v1801, %v1807
    %v1809 = vadd.f32 %v1808, 0.18741608
    %v1810 = vmul.f32 %v1801, %v1809
    %v1811 = vadd.f32 %v1810, 1.1283791
    %v1812 = vmul.f32 %v1759, %v1811
    %v1813 = vmul.f32 %v1801, 3.8918573e-05
    %v1814 = vadd.f32 %v1813, 0.001143296
    %v1815 = vmul.f32 %v1801, %v1814
    %v1816 = vadd.f32 %v1815, 0.014752088
    %v1817 = vmul.f32 %v1801, %v1816
    %v1818 = vadd.f32 %v1817, 0.112945676
    %v1819 = vmul.f32 %v1801, %v1818
    %v1820 = vadd.f32 %v1819, 0.4994258
    %v1821 = vmul.f32 %v1801, %v1820
    %v1822 = vadd.f32 %v1821, 1.0
    %v1823 = vrcp.pop %v1822
    %v1824 = vmul.f32 %v1822, %v1823
    %v1825 = vsub.f32 1.0, %v1824
    %v1826 = vmul.f32 %v1823, %v1825
    %v1827 = vadd.f32 %v1823, %v1826
    %vm1828 = vweird.f32 %v1822
    %vm1829 = vweird.f32 %v1823
    %vm1830 = vmor %vm1828, %vm1829
    %v1831 = vsel %vm1830, %v1823, %v1827
    %v1832 = vand.u32 2147483647, %v1822
    %vm1833 = vcmp.eq.f32.partialorder %v1832, 8.507059e+37
    %v1834 = vand.u32 %v1822, 2147483648
    %v1835 = vor.u32 1.1754944e-38, %v1834
    %v1836 = vsel %vm1833, %v1835, %v1831
    %v1837 = vmul.f32 %v1812, %v1836
    %v1838 = vmin.f32 %v1837, 1.0
    %v1839 = vmax.f32 %v1838, -1.0
    %v1840 = vadd.f32 %v1799, 1.0
    %v1841 = vadd.f32 %v1839, 1.0
    %v1842 = vmul.f32 %v1756, %v1840
    %v1843 = vmul.f32 %v1757, %v1841
    %s1844 = scalar_lea.vmem %s11, 128
    %v1845 = vld [vmem:[%s1844] sm:$0xff]
    %v1846 = vld [vmem:[%s1844 + $0x8] sm:$0xff]
    %v1847 = vld [vmem:[%s1844 + $0x10] sm:$0xff]
    %v1848 = vld [vmem:[%s1844 + $0x18] sm:$0xff]
    %v1849 = vld [vmem:[%s1844 + $0x20] sm:$0xff]
    %v1850 = vld [vmem:[%s1844 + $0x28] sm:$0xff]
    %v1851 = vld [vmem:[%s1844 + $0x30] sm:$0xff]
    %v1852 = vld [vmem:[%s1844 + $0x38] sm:$0xff]
    %v1853 = vld [vmem:[%s1844 + $0x40] sm:$0xff]
    %v1854 = vld [vmem:[%s1844 + $0x48] sm:$0xff]
    %v1855 = vld [vmem:[%s1844 + $0x50] sm:$0xff]
    %v1856 = vld [vmem:[%s1844 + $0x58] sm:$0xff]
    %v1857 = vld [vmem:[%s1844 + $0x60] sm:$0xff]
    %v1858 = vld [vmem:[%s1844 + $0x68] sm:$0xff]
    %v1859 = vld [vmem:[%s1844 + $0x70] sm:$0xff]
    %v1860 = vld [vmem:[%s1844 + $0x78] sm:$0xff]
    %s1861 = scalar_lea.vmem %s12, 1
    %v1862 = vld [vmem:[%s1861] sm:$0x1]
    %v1864 = vperm.slane %v1862, 0
    %1866 = vmatpush.msra.mxu0 %v1860
    %1867 = vmatpush.msra.mxu0 %v1859
    %1868 = vmatpush.msra.mxu0 %v1858
    %1869 = vmatpush.msra.mxu0 %v1857
    %1870 = vmatpush.msra.mxu0 %v1856
    %1871 = vmatpush.msra.mxu0 %v1855
    %1872 = vmatpush.msra.mxu0 %v1854
    %1873 = vmatpush.msra.mxu0 %v1853
    %1874 = vmatpush.msra.mxu0 %v1852
    %1875 = vmatpush.msra.mxu0 %v1851
    %1876 = vmatpush.msra.mxu0 %v1850
    %1877 = vmatpush.msra.mxu0 %v1849
    %1878 = vmatpush.msra.mxu0 %v1848
    %1879 = vmatpush.msra.mxu0 %v1847
    %1880 = vmatpush.msra.mxu0 %v1846
    %1881 = vmatpush.msra.mxu0 %v1845
    %1882 = vmatmul.f32.gmra.mxu0 %v1842
    %v1883 = vpop.f32.mrf.mxu0
    %v1884 = vadd.f32 %v1864, %v1883
    %1885 = vmatmul.f32.gmra.mxu0 %v1843
    %v1886 = vpop.f32.mrf.mxu0
    %v1887 = vadd.f32 %v1864, %v1886
    %1888 = vdwg.mxu0
    %v1889 = vadd.f32 %v1715, %v1884
    %v1890 = vadd.f32 %v1716, %v1887
    %v1891 = vld [vmem:[%s13] sm:$0x1]
    %v1892 = vld [vmem:[%s14] sm:$0x1]
    %v1893 = vsel %vm59, %v1889, 0.0
    %1894 = vadd.xlane.f32.xlu0 %v1893
    %v1895 = vpop.xlane.xlu0 %1894
    %v1896 = vsel %vm59, %v1890, 0.0
    %1897 = vadd.xlane.f32.xlu0 %v1896
    %v1898 = vpop.xlane.xlu0 %1897
    %v1899 = vmul.f32 %v1895, %v72
    %v1900 = vmul.f32 %v1898, %v72
    %v1901 = vsub.f32 %v1889, %v1899
    %v1902 = vsub.f32 %v1890, %v1900
    %v1903 = vmul.f32 %v1901, %v1901
    %v1904 = vmul.f32 %v1902, %v1902
    %v1905 = vsel %vm59, %v1903, 0.0
    %1906 = vadd.xlane.f32.xlu0 %v1905
    %v1907 = vpop.xlane.xlu0 %1906
    %v1908 = vsel %vm59, %v1904, 0.0
    %1909 = vadd.xlane.f32.xlu0 %v1908
    %v1910 = vpop.xlane.xlu0 %1909
    %v1911 = vmul.f32 %v1907, %v72
    %v1912 = vmul.f32 %v1910, %v72
    %v1913 = vadd.f32 %v1911, 1e-05
    %v1914 = vadd.f32 %v1912, 1e-05
    %v1915 = vrsqrt.pop %v1913
    %v1916 = vmul.f32 %v1915, %v1913
    %v1917 = vmul.f32 %v1916, %v1915
    %v1918 = vmul.f32 0.5, %v1917
    %v1919 = vsub.f32 1.5, %v1918
    %v1920 = vmul.f32 %v1915, %v1919
    %vm1921 = vweird.f32 %v1913
    %vm1922 = vweird.f32 %v1915
    %vm1923 = vmor %vm1921, %vm1922
    %v1924 = vsel %vm1923, %v1915, %v1920
    %v1925 = vrsqrt.pop %v1914
    %v1926 = vmul.f32 %v1925, %v1914
    %v1927 = vmul.f32 %v1926, %v1925
    %v1928 = vmul.f32 0.5, %v1927
    %v1929 = vsub.f32 1.5, %v1928
    %v1930 = vmul.f32 %v1925, %v1929
    %vm1931 = vweird.f32 %v1914
    %vm1932 = vweird.f32 %v1925
    %vm1933 = vmor %vm1931, %vm1932
    %v1934 = vsel %vm1933, %v1925, %v1930
    %v1935 = vmul.f32 %v1901, %v1924
    %v1936 = vmul.f32 %v1902, %v1934
    %v1938 = vperm.slane %v1891, 0
    %v1940 = vmul.f32 %v1935, %v1938
    %v1941 = vmul.f32 %v1936, %v1938
    %v1943 = vperm.slane %v1892, 0
    %v1945 = vadd.f32 %v1940, %v1943
    %v1946 = vadd.f32 %v1941, %v1943
    %1947 = vst.msk [vmem:[#allocation2] sm:$0xff] %vm59, %v1945
    %1948 = vst.msk [vmem:[#allocation2 + $0x8] sm:$0xff] %vm59, %v1946
    // Predicated region
    $region62: #{tpu_custom_call.1} parent=1 // pred_check
      _
    $region63: #{tpu_custom_call.1} parent=1 // pred_check_branch
      %1950 = sbr.rel (0) target = $region65
    $region64: #{tpu_custom_call.1} parent=1 // pred_region
      %1952 = vsyncadd [#allocation3], 0
      %s1953 = sshll.u32 [#allocation2], 4
      %s1954 = int_to_ptr.vmem [resolvable:$true] %s1953
      %s1955 = sshll.u32 %s15, 4
      %s1956 = int_to_ptr.hbm [resolvable:$true] %s1955
      %1961 = dma.vmem_to_hbm [thread:$0]  %s1954, 256, %s1956, [#allocation3], 128, 128, 8
    $region65: #{tpu_custom_call.1} parent=1 // pred_fallthru
      _
    // Predicated region
    $region66: #{tpu_custom_call.1} parent=1 // pred_check
      _
    $region67: #{tpu_custom_call.1} parent=1 // pred_check_branch
      %1963 = sbr.rel (0) target = $region69
    $region68: #{tpu_custom_call.1} parent=1 // pred_region
      %1965 = dma.done [#allocation3], 256
    $region69: #{tpu_custom_call.1} parent=1 // pred_fallthru
      _
    %1966 = vsyncpa [#allocation3], 1

</llo_original>
